<compile_context>
chip_gen: v5e
topology: v5e:2x2
jax: 0.10.0
libtpu: 0.0.40
codegen_flags: <defaults>
</compile_context>

<pallas_src>
import functools
import math

import jax
import jax.numpy as jnp
from jax import lax
from jax.experimental import pallas as pl
from jax.experimental.pallas import tpu as pltpu


_UNROLL_LIMIT = 32   # above this, switch to lax.fori_loop to bound compile time / vreg pressure


def _gru_classifier_kernel(x_ref, wih0_ref, whh0_ref, b0_ref, bhh0n_ref,
                           w1_ref, b1_ref, wlin_ref, blin_ref,
                           out_ref, gx0_ref, *, hidden, seq_len):
    """Whole forward pass in one kernel invocation (arrays are tiny; no grid)."""
    H, T = hidden, seq_len
    f32 = jnp.float32

    def dot(a, b):
        return jnp.dot(a, b, preferred_element_type=f32)

    # ---- Hoist loop-invariant, lane-dense fused weight tiles (~16 vregs total).
    whh0 = whh0_ref[...]        # (H, 3H)   recurrent, gates [r|z|n] on lane axis
    bhh0n = bhh0n_ref[...]      # (1, H)    layer-0 n-gate recurrent bias (r-gated)
    w1 = w1_ref[...]            # (2H, 4H)  [wih1 ; whh1], columns [r|z|n_in|n_rec]
    b1 = b1_ref[...]            # (1, 4H)   [bir+bhr | biz+bhz | bin | bhn]
    wlin = wlin_ref[...]        # (1, H)

    def step(h0, h1, acc, gx0_row):
        # ---- GRU layer 0: single (1,H)x(H,3H) MXU op; r/z biases already in gx0_row.
        gh0 = dot(h0, whh0)                                          # (1, 3H)
        rz0 = jax.nn.sigmoid(gx0_row[:, :2 * H] + gh0[:, :2 * H])    # one EUP push
        r0 = rz0[:, :H]
        z0 = rz0[:, H:]
        n0 = jnp.tanh(gx0_row[:, 2 * H:] + r0 * (gh0[:, 2 * H:] + bhh0n))
        h0 = (1.0 - z0) * n0 + z0 * h0

        # ---- GRU layer 1: single fused (1,2H)x(2H,4H) MXU op over [h0|h1].
        g1 = dot(jnp.concatenate([h0, h1], axis=1), w1) + b1         # (1, 4H)
        rz1 = jax.nn.sigmoid(g1[:, :2 * H])
        r1 = rz1[:, :H]
        z1 = rz1[:, H:]
        n1 = jnp.tanh(g1[:, 2 * H:3 * H] + r1 * g1[:, 3 * H:])
        h1 = (1.0 - z1) * n1 + z1 * h1

        # ---- ReLU + hidden2weight contribution (lane-wise; reduce once at the end).
        acc = acc + jnp.maximum(h1, 0.0) * wlin
        return h0, h1, acc

    h0 = jnp.zeros((1, H), f32)
    h1 = jnp.zeros((1, H), f32)
    acc = jnp.zeros((1, H), f32)

    if T <= _UNROLL_LIMIT:
        # Layer-0 input contributions for all timesteps in one fused-gate matmul;
        # r/z input+recurrent biases and the n input bias are pre-folded into b0.
        gx0 = dot(x_ref[...], wih0_ref[...]) + b0_ref[...]           # (T, 3H)
        # Fully unrolled wavefront: LLO scheduler interleaves the two layers' chains.
        for t in range(T):
            h0, h1, acc = step(h0, h1, acc, gx0[t:t + 1, :])
    else:
        # Large-T guard: keep gx0 in VMEM scratch, partially-unrolled dynamic loop.
        gx0_ref[...] = dot(x_ref[...], wih0_ref[...]) + b0_ref[...]

        def body(t, carry):
            h0_, h1_, acc_ = carry
            row = gx0_ref[pl.ds(t, 1), :]
            return step(h0_, h1_, acc_, row)

        h0, h1, acc = lax.fori_loop(0, T, body, (h0, h1, acc), unroll=4)

    # sum_t (relu(h1_t) . w + b)  ==  sum(acc) + T * b
    total = jnp.sum(acc) + float(T) * blin_ref[0]
    out_ref[...] = jnp.reshape(total, (1, 1))


def _pack_params(params):
    """Fuse gates on the lane axis and pre-fold r/z biases (host-side, once)."""
    H = params["whh0"].shape[-1]
    zeros = jnp.zeros((H, H), jnp.float32)
    # Layer 0
    wih0 = jnp.concatenate([params["wih0"][g] for g in range(3)], axis=1)    # (I, 3H)
    whh0 = jnp.concatenate([params["whh0"][g] for g in range(3)], axis=1)    # (H, 3H)
    b0 = jnp.concatenate([params["bih0"][0] + params["bhh0"][0],
                          params["bih0"][1] + params["bhh0"][1],
                          params["bih0"][2]], axis=1)                        # (1, 3H)
    bhh0n = params["bhh0"][2]                                                # (1, H)
    # Layer 1: rows 0..H-1 act on h0 (input path), rows H..2H-1 on h1 (recurrent path).
    # Columns: [r | z | n_input | n_recurrent].
    w1_top = jnp.concatenate([params["wih1"][0], params["wih1"][1],
                              params["wih1"][2], zeros], axis=1)             # (H, 4H)
    w1_bot = jnp.concatenate([params["whh1"][0], params["whh1"][1],
                              zeros, params["whh1"][2]], axis=1)             # (H, 4H)
    w1 = jnp.concatenate([w1_top, w1_bot], axis=0)                           # (2H, 4H)
    b1 = jnp.concatenate([params["bih1"][0] + params["bhh1"][0],
                          params["bih1"][1] + params["bhh1"][1],
                          params["bih1"][2], params["bhh1"][2]], axis=1)     # (1, 4H)
    return wih0, whh0, b0, bhh0n, w1, b1


def stock_price_classifier(x, params):
    """x: (T, input_size) float32 -> scalar float32."""
    T, _ = x.shape
    H = params["whh0"].shape[-1]
    wih0, whh0, b0, bhh0n, w1, b1 = _pack_params(params)
    kernel = functools.partial(_gru_classifier_kernel, hidden=H, seq_len=T)
    vmem = pl.BlockSpec(memory_space=pltpu.MemorySpace.VMEM)
    smem = pl.BlockSpec(memory_space=pltpu.MemorySpace.SMEM)
    out = pl.pallas_call(
        kernel,
        out_shape=jax.ShapeDtypeStruct((1, 1), jnp.float32),
        in_specs=[vmem] * 8 + [smem],
        out_specs=vmem,
        scratch_shapes=[pltpu.VMEM((T, 3 * H), jnp.float32)],   # gx0 (only used for large T)
    )(x, wih0, whh0, b0, bhh0n, w1, b1, params["wlin"], params["blin"])
    return out.reshape(())


def init_params(key, input_size, hidden):
    """Deterministic synthetic params, PyTorch-style U(-1/sqrt(H), 1/sqrt(H)).

    Per-gate packed layout (gate order r, z, n matching torch.nn.GRU).
    """
    H = hidden
    k = 1.0 / math.sqrt(H)
    keys = jax.random.split(key, 10)

    def u(kk, shape):
        return jax.random.uniform(kk, shape, jnp.float32, -k, k)

    return {
        # layer 0  (input_size -> H)
        "wih0": u(keys[0], (3, input_size, H)),
        "whh0": u(keys[1], (3, H, H)),
        "bih0": u(keys[2], (3, 1, H)),
        "bhh0": u(keys[3], (3, 1, H)),
        # layer 1  (H -> H)
        "wih1": u(keys[4], (3, H, H)),
        "whh1": u(keys[5], (3, H, H)),
        "bih1": u(keys[6], (3, 1, H)),
        "bhh1": u(keys[7], (3, 1, H)),
        # hidden2weight: Linear(H, 1)
        "wlin": u(keys[8], (1, H)),
        "blin": u(keys[9], (1,)),
    }


def reference(x, params):
    """Pure-JAX reference matching torch.nn.GRU(num_layers=2) + ReLU + Linear + sum."""
    H = params["whh0"].shape[-1]

    def layer(inp, wih, whh, bih, bhh):
        def step(h, xt):
            xt = xt[None, :]
            r = jax.nn.sigmoid(xt @ wih[0] + bih[0] + h @ whh[0] + bhh[0])
            z = jax.nn.sigmoid(xt @ wih[1] + bih[1] + h @ whh[1] + bhh[1])
            n = jnp.tanh(xt @ wih[2] + bih[2] + r * (h @ whh[2] + bhh[2]))
            h_new = (1.0 - z) * n + z * h
            return h_new, h_new[0]

        _, ys = lax.scan(step, jnp.zeros((1, H), jnp.float32), inp)
        return ys                                            # (T, H)

    h0 = layer(x, params["wih0"], params["whh0"], params["bih0"], params["bhh0"])
    h1 = layer(h0, params["wih1"], params["whh1"], params["bih1"], params["bhh1"])
    h1 = jnp.maximum(h1, 0.0)
    w = h1 @ params["wlin"].T + params["blin"]               # (T, 1)
    return jnp.sum(w, axis=0).reshape(())


if __name__ == "__main__":
    # cfg = {'input_size': 16, 'gru_hidden_size': 32, 'gru_num_layers': 2}
    SEQ_LEN, INPUT_SIZE, HIDDEN = 8, 16, 32

    key = jax.random.PRNGKey(0)
    kx, kp = jax.random.split(key)
    x1 = jax.random.normal(kx, (SEQ_LEN, INPUT_SIZE), jnp.float32)
    params = init_params(kp, INPUT_SIZE, HIDDEN)

    out = jax.block_until_ready(stock_price_classifier(x1, params))
    ref = jax.block_until_ready(reference(x1, params))

    assert out.shape == (), out.shape
    assert jnp.allclose(out, ref, rtol=1e-4, atol=1e-4), (out, ref)
    print("KERNEL_OK")
</pallas_src>

<mosaic_0001>
module attributes {stable_mosaic.version = 11 : i64} {
  func.func @_gru_classifier_kernel(%arg0: memref<8x16xf32, #tpu.memory_space<vmem>>, %arg1: memref<16x96xf32, #tpu.memory_space<vmem>>, %arg2: memref<32x96xf32, #tpu.memory_space<vmem>>, %arg3: memref<1x96xf32, #tpu.memory_space<vmem>>, %arg4: memref<1x32xf32, #tpu.memory_space<vmem>>, %arg5: memref<64x128xf32, #tpu.memory_space<vmem>>, %arg6: memref<1x128xf32, #tpu.memory_space<vmem>>, %arg7: memref<1x32xf32, #tpu.memory_space<vmem>>, %arg8: memref<1xf32, #tpu.memory_space<smem>>, %arg9: memref<1x1xf32, #tpu.memory_space<vmem>>, %arg10: memref<8x96xf32, #tpu.memory_space<vmem>>) attributes {dimension_semantics = [], scalar_prefetch = 0 : i64, scratch_operands = 1 : i64, tpu.core_type = #tpu.core_type<tc>} {
    %c0 = arith.constant 0 : index
    %c0_0 = arith.constant 0 : index
    %0 = vector.load %arg2[%c0, %c0_0] : memref<32x96xf32, #tpu.memory_space<vmem>>, vector<32x96xf32>
    %c0_1 = arith.constant 0 : index
    %c0_2 = arith.constant 0 : index
    %1 = vector.load %arg4[%c0_1, %c0_2] : memref<1x32xf32, #tpu.memory_space<vmem>>, vector<1x32xf32>
    %c0_3 = arith.constant 0 : index
    %c0_4 = arith.constant 0 : index
    %2 = vector.load %arg5[%c0_3, %c0_4] : memref<64x128xf32, #tpu.memory_space<vmem>>, vector<64x128xf32>
    %c0_5 = arith.constant 0 : index
    %c0_6 = arith.constant 0 : index
    %3 = vector.load %arg6[%c0_5, %c0_6] : memref<1x128xf32, #tpu.memory_space<vmem>>, vector<1x128xf32>
    %c0_7 = arith.constant 0 : index
    %c0_8 = arith.constant 0 : index
    %4 = vector.load %arg7[%c0_7, %c0_8] : memref<1x32xf32, #tpu.memory_space<vmem>>, vector<1x32xf32>
    %cst = arith.constant 0.000000e+00 : f32
    %5 = vector.broadcast %cst : f32 to vector<1x32xf32>
    %cst_9 = arith.constant 0.000000e+00 : f32
    %6 = vector.broadcast %cst_9 : f32 to vector<1x32xf32>
    %cst_10 = arith.constant 0.000000e+00 : f32
    %7 = vector.broadcast %cst_10 : f32 to vector<1x32xf32>
    %c0_11 = arith.constant 0 : index
    %c0_12 = arith.constant 0 : index
    %8 = vector.load %arg0[%c0_11, %c0_12] : memref<8x16xf32, #tpu.memory_space<vmem>>, vector<8x16xf32>
    %c0_13 = arith.constant 0 : index
    %c0_14 = arith.constant 0 : index
    %9 = vector.load %arg1[%c0_13, %c0_14] : memref<16x96xf32, #tpu.memory_space<vmem>>, vector<16x96xf32>
    %cst_15 = arith.constant dense<0.000000e+00> : vector<8x96xf32>
    %10 = tpu.matmul %8, %9, %cst_15 {dimension_numbers = #tpu.dot_dimension_numbers<[1], [0], [0], [1], [0, 0, 1, 1], [], []>} : vector<8x16xf32>, vector<16x96xf32>, vector<8x96xf32> -> vector<8x96xf32>
    %c0_16 = arith.constant 0 : index
    %c0_17 = arith.constant 0 : index
    %11 = vector.load %arg3[%c0_16, %c0_17] : memref<1x96xf32, #tpu.memory_space<vmem>>, vector<1x96xf32>
    %12 = vector.broadcast %11 : vector<1x96xf32> to vector<8x96xf32>
    %13 = arith.addf %10, %12 : vector<8x96xf32>
    %14 = vector.extract_strided_slice %13 {offsets = [0, 0], sizes = [1, 96], strides = [1, 1]} : vector<8x96xf32> to vector<1x96xf32>
    %cst_18 = arith.constant dense<0.000000e+00> : vector<1x96xf32>
    %15 = tpu.matmul %5, %0, %cst_18 {dimension_numbers = #tpu.dot_dimension_numbers<[1], [0], [0], [1], [0, 0, 1, 1], [], []>} : vector<1x32xf32>, vector<32x96xf32>, vector<1x96xf32> -> vector<1x96xf32>
    %16 = vector.extract_strided_slice %14 {offsets = [0, 0], sizes = [1, 64], strides = [1, 1]} : vector<1x96xf32> to vector<1x64xf32>
    %17 = vector.extract_strided_slice %15 {offsets = [0, 0], sizes = [1, 64], strides = [1, 1]} : vector<1x96xf32> to vector<1x64xf32>
    %18 = arith.addf %16, %17 : vector<1x64xf32>
    %19 = arith.negf %18 : vector<1x64xf32>
    %20 = math.exp %19 : vector<1x64xf32>
    %cst_19 = arith.constant 1.000000e+00 : f32
    %21 = vector.broadcast %cst_19 : f32 to vector<1x64xf32>
    %22 = arith.addf %21, %20 : vector<1x64xf32>
    %23 = arith.divf %21, %22 : vector<1x64xf32>
    %24 = vector.extract_strided_slice %23 {offsets = [0, 0], sizes = [1, 32], strides = [1, 1]} : vector<1x64xf32> to vector<1x32xf32>
    %25 = vector.extract_strided_slice %23 {offsets = [0, 32], sizes = [1, 32], strides = [1, 1]} : vector<1x64xf32> to vector<1x32xf32>
    %26 = vector.extract_strided_slice %14 {offsets = [0, 64], sizes = [1, 32], strides = [1, 1]} : vector<1x96xf32> to vector<1x32xf32>
    %27 = vector.extract_strided_slice %15 {offsets = [0, 64], sizes = [1, 32], strides = [1, 1]} : vector<1x96xf32> to vector<1x32xf32>
    %28 = arith.addf %27, %1 : vector<1x32xf32>
    %29 = arith.mulf %24, %28 : vector<1x32xf32>
    %30 = arith.addf %26, %29 : vector<1x32xf32>
    %31 = math.tanh %30 : vector<1x32xf32>
    %cst_20 = arith.constant 1.000000e+00 : f32
    %32 = vector.broadcast %cst_20 : f32 to vector<1x32xf32>
    %33 = arith.subf %32, %25 : vector<1x32xf32>
    %34 = arith.mulf %33, %31 : vector<1x32xf32>
    %35 = arith.mulf %25, %5 : vector<1x32xf32>
    %36 = arith.addf %34, %35 : vector<1x32xf32>
    %37 = tpu.concatenate %36, %6 in 1 : vector<1x32xf32>, vector<1x32xf32> -> vector<1x64xf32>
    %cst_21 = arith.constant dense<0.000000e+00> : vector<1x128xf32>
    %38 = tpu.matmul %37, %2, %cst_21 {dimension_numbers = #tpu.dot_dimension_numbers<[1], [0], [0], [1], [0, 0, 1, 1], [], []>} : vector<1x64xf32>, vector<64x128xf32>, vector<1x128xf32> -> vector<1x128xf32>
    %39 = arith.addf %38, %3 : vector<1x128xf32>
    %40 = vector.extract_strided_slice %39 {offsets = [0, 0], sizes = [1, 64], strides = [1, 1]} : vector<1x128xf32> to vector<1x64xf32>
    %41 = arith.negf %40 : vector<1x64xf32>
    %42 = math.exp %41 : vector<1x64xf32>
    %cst_22 = arith.constant 1.000000e+00 : f32
    %43 = vector.broadcast %cst_22 : f32 to vector<1x64xf32>
    %44 = arith.addf %43, %42 : vector<1x64xf32>
    %45 = arith.divf %43, %44 : vector<1x64xf32>
    %46 = vector.extract_strided_slice %45 {offsets = [0, 0], sizes = [1, 32], strides = [1, 1]} : vector<1x64xf32> to vector<1x32xf32>
    %47 = vector.extract_strided_slice %45 {offsets = [0, 32], sizes = [1, 32], strides = [1, 1]} : vector<1x64xf32> to vector<1x32xf32>
    %48 = vector.extract_strided_slice %39 {offsets = [0, 64], sizes = [1, 32], strides = [1, 1]} : vector<1x128xf32> to vector<1x32xf32>
    %49 = vector.extract_strided_slice %39 {offsets = [0, 96], sizes = [1, 32], strides = [1, 1]} : vector<1x128xf32> to vector<1x32xf32>
    %50 = arith.mulf %46, %49 : vector<1x32xf32>
    %51 = arith.addf %48, %50 : vector<1x32xf32>
    %52 = math.tanh %51 : vector<1x32xf32>
    %cst_23 = arith.constant 1.000000e+00 : f32
    %53 = vector.broadcast %cst_23 : f32 to vector<1x32xf32>
    %54 = arith.subf %53, %47 : vector<1x32xf32>
    %55 = arith.mulf %54, %52 : vector<1x32xf32>
    %56 = arith.mulf %47, %6 : vector<1x32xf32>
    %57 = arith.addf %55, %56 : vector<1x32xf32>
    %cst_24 = arith.constant 0.000000e+00 : f32
    %58 = vector.broadcast %cst_24 : f32 to vector<1x32xf32>
    %59 = arith.maximumf %57, %58 : vector<1x32xf32>
    %60 = arith.mulf %59, %4 : vector<1x32xf32>
    %61 = arith.addf %7, %60 : vector<1x32xf32>
    %62 = vector.extract_strided_slice %13 {offsets = [1, 0], sizes = [1, 96], strides = [1, 1]} : vector<8x96xf32> to vector<1x96xf32>
    %cst_25 = arith.constant dense<0.000000e+00> : vector<1x96xf32>
    %63 = tpu.matmul %36, %0, %cst_25 {dimension_numbers = #tpu.dot_dimension_numbers<[1], [0], [0], [1], [0, 0, 1, 1], [], []>} : vector<1x32xf32>, vector<32x96xf32>, vector<1x96xf32> -> vector<1x96xf32>
    %64 = vector.extract_strided_slice %62 {offsets = [0, 0], sizes = [1, 64], strides = [1, 1]} : vector<1x96xf32> to vector<1x64xf32>
    %65 = vector.extract_strided_slice %63 {offsets = [0, 0], sizes = [1, 64], strides = [1, 1]} : vector<1x96xf32> to vector<1x64xf32>
    %66 = arith.addf %64, %65 : vector<1x64xf32>
    %67 = arith.negf %66 : vector<1x64xf32>
    %68 = math.exp %67 : vector<1x64xf32>
    %cst_26 = arith.constant 1.000000e+00 : f32
    %69 = vector.broadcast %cst_26 : f32 to vector<1x64xf32>
    %70 = arith.addf %69, %68 : vector<1x64xf32>
    %71 = arith.divf %69, %70 : vector<1x64xf32>
    %72 = vector.extract_strided_slice %71 {offsets = [0, 0], sizes = [1, 32], strides = [1, 1]} : vector<1x64xf32> to vector<1x32xf32>
    %73 = vector.extract_strided_slice %71 {offsets = [0, 32], sizes = [1, 32], strides = [1, 1]} : vector<1x64xf32> to vector<1x32xf32>
    %74 = vector.extract_strided_slice %62 {offsets = [0, 64], sizes = [1, 32], strides = [1, 1]} : vector<1x96xf32> to vector<1x32xf32>
    %75 = vector.extract_strided_slice %63 {offsets = [0, 64], sizes = [1, 32], strides = [1, 1]} : vector<1x96xf32> to vector<1x32xf32>
    %76 = arith.addf %75, %1 : vector<1x32xf32>
    %77 = arith.mulf %72, %76 : vector<1x32xf32>
    %78 = arith.addf %74, %77 : vector<1x32xf32>
    %79 = math.tanh %78 : vector<1x32xf32>
    %cst_27 = arith.constant 1.000000e+00 : f32
    %80 = vector.broadcast %cst_27 : f32 to vector<1x32xf32>
    %81 = arith.subf %80, %73 : vector<1x32xf32>
    %82 = arith.mulf %81, %79 : vector<1x32xf32>
    %83 = arith.mulf %73, %36 : vector<1x32xf32>
    %84 = arith.addf %82, %83 : vector<1x32xf32>
    %85 = tpu.concatenate %84, %57 in 1 : vector<1x32xf32>, vector<1x32xf32> -> vector<1x64xf32>
    %cst_28 = arith.constant dense<0.000000e+00> : vector<1x128xf32>
    %86 = tpu.matmul %85, %2, %cst_28 {dimension_numbers = #tpu.dot_dimension_numbers<[1], [0], [0], [1], [0, 0, 1, 1], [], []>} : vector<1x64xf32>, vector<64x128xf32>, vector<1x128xf32> -> vector<1x128xf32>
    %87 = arith.addf %86, %3 : vector<1x128xf32>
    %88 = vector.extract_strided_slice %87 {offsets = [0, 0], sizes = [1, 64], strides = [1, 1]} : vector<1x128xf32> to vector<1x64xf32>
    %89 = arith.negf %88 : vector<1x64xf32>
    %90 = math.exp %89 : vector<1x64xf32>
    %cst_29 = arith.constant 1.000000e+00 : f32
    %91 = vector.broadcast %cst_29 : f32 to vector<1x64xf32>
    %92 = arith.addf %91, %90 : vector<1x64xf32>
    %93 = arith.divf %91, %92 : vector<1x64xf32>
    %94 = vector.extract_strided_slice %93 {offsets = [0, 0], sizes = [1, 32], strides = [1, 1]} : vector<1x64xf32> to vector<1x32xf32>
    %95 = vector.extract_strided_slice %93 {offsets = [0, 32], sizes = [1, 32], strides = [1, 1]} : vector<1x64xf32> to vector<1x32xf32>
    %96 = vector.extract_strided_slice %87 {offsets = [0, 64], sizes = [1, 32], strides = [1, 1]} : vector<1x128xf32> to vector<1x32xf32>
    %97 = vector.extract_strided_slice %87 {offsets = [0, 96], sizes = [1, 32], strides = [1, 1]} : vector<1x128xf32> to vector<1x32xf32>
    %98 = arith.mulf %94, %97 : vector<1x32xf32>
    %99 = arith.addf %96, %98 : vector<1x32xf32>
    %100 = math.tanh %99 : vector<1x32xf32>
    %cst_30 = arith.constant 1.000000e+00 : f32
    %101 = vector.broadcast %cst_30 : f32 to vector<1x32xf32>
    %102 = arith.subf %101, %95 : vector<1x32xf32>
    %103 = arith.mulf %102, %100 : vector<1x32xf32>
    %104 = arith.mulf %95, %57 : vector<1x32xf32>
    %105 = arith.addf %103, %104 : vector<1x32xf32>
    %cst_31 = arith.constant 0.000000e+00 : f32
    %106 = vector.broadcast %cst_31 : f32 to vector<1x32xf32>
    %107 = arith.maximumf %105, %106 : vector<1x32xf32>
    %108 = arith.mulf %107, %4 : vector<1x32xf32>
    %109 = arith.addf %61, %108 : vector<1x32xf32>
    %110 = vector.extract_strided_slice %13 {offsets = [2, 0], sizes = [1, 96], strides = [1, 1]} : vector<8x96xf32> to vector<1x96xf32>
    %cst_32 = arith.constant dense<0.000000e+00> : vector<1x96xf32>
    %111 = tpu.matmul %84, %0, %cst_32 {dimension_numbers = #tpu.dot_dimension_numbers<[1], [0], [0], [1], [0, 0, 1, 1], [], []>} : vector<1x32xf32>, vector<32x96xf32>, vector<1x96xf32> -> vector<1x96xf32>
    %112 = vector.extract_strided_slice %110 {offsets = [0, 0], sizes = [1, 64], strides = [1, 1]} : vector<1x96xf32> to vector<1x64xf32>
    %113 = vector.extract_strided_slice %111 {offsets = [0, 0], sizes = [1, 64], strides = [1, 1]} : vector<1x96xf32> to vector<1x64xf32>
    %114 = arith.addf %112, %113 : vector<1x64xf32>
    %115 = arith.negf %114 : vector<1x64xf32>
    %116 = math.exp %115 : vector<1x64xf32>
    %cst_33 = arith.constant 1.000000e+00 : f32
    %117 = vector.broadcast %cst_33 : f32 to vector<1x64xf32>
    %118 = arith.addf %117, %116 : vector<1x64xf32>
    %119 = arith.divf %117, %118 : vector<1x64xf32>
    %120 = vector.extract_strided_slice %119 {offsets = [0, 0], sizes = [1, 32], strides = [1, 1]} : vector<1x64xf32> to vector<1x32xf32>
    %121 = vector.extract_strided_slice %119 {offsets = [0, 32], sizes = [1, 32], strides = [1, 1]} : vector<1x64xf32> to vector<1x32xf32>
    %122 = vector.extract_strided_slice %110 {offsets = [0, 64], sizes = [1, 32], strides = [1, 1]} : vector<1x96xf32> to vector<1x32xf32>
    %123 = vector.extract_strided_slice %111 {offsets = [0, 64], sizes = [1, 32], strides = [1, 1]} : vector<1x96xf32> to vector<1x32xf32>
    %124 = arith.addf %123, %1 : vector<1x32xf32>
    %125 = arith.mulf %120, %124 : vector<1x32xf32>
    %126 = arith.addf %122, %125 : vector<1x32xf32>
    %127 = math.tanh %126 : vector<1x32xf32>
    %cst_34 = arith.constant 1.000000e+00 : f32
    %128 = vector.broadcast %cst_34 : f32 to vector<1x32xf32>
    %129 = arith.subf %128, %121 : vector<1x32xf32>
    %130 = arith.mulf %129, %127 : vector<1x32xf32>
    %131 = arith.mulf %121, %84 : vector<1x32xf32>
    %132 = arith.addf %130, %131 : vector<1x32xf32>
    %133 = tpu.concatenate %132, %105 in 1 : vector<1x32xf32>, vector<1x32xf32> -> vector<1x64xf32>
    %cst_35 = arith.constant dense<0.000000e+00> : vector<1x128xf32>
    %134 = tpu.matmul %133, %2, %cst_35 {dimension_numbers = #tpu.dot_dimension_numbers<[1], [0], [0], [1], [0, 0, 1, 1], [], []>} : vector<1x64xf32>, vector<64x128xf32>, vector<1x128xf32> -> vector<1x128xf32>
    %135 = arith.addf %134, %3 : vector<1x128xf32>
    %136 = vector.extract_strided_slice %135 {offsets = [0, 0], sizes = [1, 64], strides = [1, 1]} : vector<1x128xf32> to vector<1x64xf32>
    %137 = arith.negf %136 : vector<1x64xf32>
    %138 = math.exp %137 : vector<1x64xf32>
    %cst_36 = arith.constant 1.000000e+00 : f32
    %139 = vector.broadcast %cst_36 : f32 to vector<1x64xf32>
    %140 = arith.addf %139, %138 : vector<1x64xf32>
    %141 = arith.divf %139, %140 : vector<1x64xf32>
    %142 = vector.extract_strided_slice %141 {offsets = [0, 0], sizes = [1, 32], strides = [1, 1]} : vector<1x64xf32> to vector<1x32xf32>
    %143 = vector.extract_strided_slice %141 {offsets = [0, 32], sizes = [1, 32], strides = [1, 1]} : vector<1x64xf32> to vector<1x32xf32>
    %144 = vector.extract_strided_slice %135 {offsets = [0, 64], sizes = [1, 32], strides = [1, 1]} : vector<1x128xf32> to vector<1x32xf32>
    %145 = vector.extract_strided_slice %135 {offsets = [0, 96], sizes = [1, 32], strides = [1, 1]} : vector<1x128xf32> to vector<1x32xf32>
    %146 = arith.mulf %142, %145 : vector<1x32xf32>
    %147 = arith.addf %144, %146 : vector<1x32xf32>
    %148 = math.tanh %147 : vector<1x32xf32>
    %cst_37 = arith.constant 1.000000e+00 : f32
    %149 = vector.broadcast %cst_37 : f32 to vector<1x32xf32>
    %150 = arith.subf %149, %143 : vector<1x32xf32>
    %151 = arith.mulf %150, %148 : vector<1x32xf32>
    %152 = arith.mulf %143, %105 : vector<1x32xf32>
    %153 = arith.addf %151, %152 : vector<1x32xf32>
    %cst_38 = arith.constant 0.000000e+00 : f32
    %154 = vector.broadcast %cst_38 : f32 to vector<1x32xf32>
    %155 = arith.maximumf %153, %154 : vector<1x32xf32>
    %156 = arith.mulf %155, %4 : vector<1x32xf32>
    %157 = arith.addf %109, %156 : vector<1x32xf32>
    %158 = vector.extract_strided_slice %13 {offsets = [3, 0], sizes = [1, 96], strides = [1, 1]} : vector<8x96xf32> to vector<1x96xf32>
    %cst_39 = arith.constant dense<0.000000e+00> : vector<1x96xf32>
    %159 = tpu.matmul %132, %0, %cst_39 {dimension_numbers = #tpu.dot_dimension_numbers<[1], [0], [0], [1], [0, 0, 1, 1], [], []>} : vector<1x32xf32>, vector<32x96xf32>, vector<1x96xf32> -> vector<1x96xf32>
    %160 = vector.extract_strided_slice %158 {offsets = [0, 0], sizes = [1, 64], strides = [1, 1]} : vector<1x96xf32> to vector<1x64xf32>
    %161 = vector.extract_strided_slice %159 {offsets = [0, 0], sizes = [1, 64], strides = [1, 1]} : vector<1x96xf32> to vector<1x64xf32>
    %162 = arith.addf %160, %161 : vector<1x64xf32>
    %163 = arith.negf %162 : vector<1x64xf32>
    %164 = math.exp %163 : vector<1x64xf32>
    %cst_40 = arith.constant 1.000000e+00 : f32
    %165 = vector.broadcast %cst_40 : f32 to vector<1x64xf32>
    %166 = arith.addf %165, %164 : vector<1x64xf32>
    %167 = arith.divf %165, %166 : vector<1x64xf32>
    %168 = vector.extract_strided_slice %167 {offsets = [0, 0], sizes = [1, 32], strides = [1, 1]} : vector<1x64xf32> to vector<1x32xf32>
    %169 = vector.extract_strided_slice %167 {offsets = [0, 32], sizes = [1, 32], strides = [1, 1]} : vector<1x64xf32> to vector<1x32xf32>
    %170 = vector.extract_strided_slice %158 {offsets = [0, 64], sizes = [1, 32], strides = [1, 1]} : vector<1x96xf32> to vector<1x32xf32>
    %171 = vector.extract_strided_slice %159 {offsets = [0, 64], sizes = [1, 32], strides = [1, 1]} : vector<1x96xf32> to vector<1x32xf32>
    %172 = arith.addf %171, %1 : vector<1x32xf32>
    %173 = arith.mulf %168, %172 : vector<1x32xf32>
    %174 = arith.addf %170, %173 : vector<1x32xf32>
    %175 = math.tanh %174 : vector<1x32xf32>
    %cst_41 = arith.constant 1.000000e+00 : f32
    %176 = vector.broadcast %cst_41 : f32 to vector<1x32xf32>
    %177 = arith.subf %176, %169 : vector<1x32xf32>
    %178 = arith.mulf %177, %175 : vector<1x32xf32>
    %179 = arith.mulf %169, %132 : vector<1x32xf32>
    %180 = arith.addf %178, %179 : vector<1x32xf32>
    %181 = tpu.concatenate %180, %153 in 1 : vector<1x32xf32>, vector<1x32xf32> -> vector<1x64xf32>
    %cst_42 = arith.constant dense<0.000000e+00> : vector<1x128xf32>
    %182 = tpu.matmul %181, %2, %cst_42 {dimension_numbers = #tpu.dot_dimension_numbers<[1], [0], [0], [1], [0, 0, 1, 1], [], []>} : vector<1x64xf32>, vector<64x128xf32>, vector<1x128xf32> -> vector<1x128xf32>
    %183 = arith.addf %182, %3 : vector<1x128xf32>
    %184 = vector.extract_strided_slice %183 {offsets = [0, 0], sizes = [1, 64], strides = [1, 1]} : vector<1x128xf32> to vector<1x64xf32>
    %185 = arith.negf %184 : vector<1x64xf32>
    %186 = math.exp %185 : vector<1x64xf32>
    %cst_43 = arith.constant 1.000000e+00 : f32
    %187 = vector.broadcast %cst_43 : f32 to vector<1x64xf32>
    %188 = arith.addf %187, %186 : vector<1x64xf32>
    %189 = arith.divf %187, %188 : vector<1x64xf32>
    %190 = vector.extract_strided_slice %189 {offsets = [0, 0], sizes = [1, 32], strides = [1, 1]} : vector<1x64xf32> to vector<1x32xf32>
    %191 = vector.extract_strided_slice %189 {offsets = [0, 32], sizes = [1, 32], strides = [1, 1]} : vector<1x64xf32> to vector<1x32xf32>
    %192 = vector.extract_strided_slice %183 {offsets = [0, 64], sizes = [1, 32], strides = [1, 1]} : vector<1x128xf32> to vector<1x32xf32>
    %193 = vector.extract_strided_slice %183 {offsets = [0, 96], sizes = [1, 32], strides = [1, 1]} : vector<1x128xf32> to vector<1x32xf32>
    %194 = arith.mulf %190, %193 : vector<1x32xf32>
    %195 = arith.addf %192, %194 : vector<1x32xf32>
    %196 = math.tanh %195 : vector<1x32xf32>
    %cst_44 = arith.constant 1.000000e+00 : f32
    %197 = vector.broadcast %cst_44 : f32 to vector<1x32xf32>
    %198 = arith.subf %197, %191 : vector<1x32xf32>
    %199 = arith.mulf %198, %196 : vector<1x32xf32>
    %200 = arith.mulf %191, %153 : vector<1x32xf32>
    %201 = arith.addf %199, %200 : vector<1x32xf32>
    %cst_45 = arith.constant 0.000000e+00 : f32
    %202 = vector.broadcast %cst_45 : f32 to vector<1x32xf32>
    %203 = arith.maximumf %201, %202 : vector<1x32xf32>
    %204 = arith.mulf %203, %4 : vector<1x32xf32>
    %205 = arith.addf %157, %204 : vector<1x32xf32>
    %206 = vector.extract_strided_slice %13 {offsets = [4, 0], sizes = [1, 96], strides = [1, 1]} : vector<8x96xf32> to vector<1x96xf32>
    %cst_46 = arith.constant dense<0.000000e+00> : vector<1x96xf32>
    %207 = tpu.matmul %180, %0, %cst_46 {dimension_numbers = #tpu.dot_dimension_numbers<[1], [0], [0], [1], [0, 0, 1, 1], [], []>} : vector<1x32xf32>, vector<32x96xf32>, vector<1x96xf32> -> vector<1x96xf32>
    %208 = vector.extract_strided_slice %206 {offsets = [0, 0], sizes = [1, 64], strides = [1, 1]} : vector<1x96xf32> to vector<1x64xf32>
    %209 = vector.extract_strided_slice %207 {offsets = [0, 0], sizes = [1, 64], strides = [1, 1]} : vector<1x96xf32> to vector<1x64xf32>
    %210 = arith.addf %208, %209 : vector<1x64xf32>
    %211 = arith.negf %210 : vector<1x64xf32>
    %212 = math.exp %211 : vector<1x64xf32>
    %cst_47 = arith.constant 1.000000e+00 : f32
    %213 = vector.broadcast %cst_47 : f32 to vector<1x64xf32>
    %214 = arith.addf %213, %212 : vector<1x64xf32>
    %215 = arith.divf %213, %214 : vector<1x64xf32>
    %216 = vector.extract_strided_slice %215 {offsets = [0, 0], sizes = [1, 32], strides = [1, 1]} : vector<1x64xf32> to vector<1x32xf32>
    %217 = vector.extract_strided_slice %215 {offsets = [0, 32], sizes = [1, 32], strides = [1, 1]} : vector<1x64xf32> to vector<1x32xf32>
    %218 = vector.extract_strided_slice %206 {offsets = [0, 64], sizes = [1, 32], strides = [1, 1]} : vector<1x96xf32> to vector<1x32xf32>
    %219 = vector.extract_strided_slice %207 {offsets = [0, 64], sizes = [1, 32], strides = [1, 1]} : vector<1x96xf32> to vector<1x32xf32>
    %220 = arith.addf %219, %1 : vector<1x32xf32>
    %221 = arith.mulf %216, %220 : vector<1x32xf32>
    %222 = arith.addf %218, %221 : vector<1x32xf32>
    %223 = math.tanh %222 : vector<1x32xf32>
    %cst_48 = arith.constant 1.000000e+00 : f32
    %224 = vector.broadcast %cst_48 : f32 to vector<1x32xf32>
    %225 = arith.subf %224, %217 : vector<1x32xf32>
    %226 = arith.mulf %225, %223 : vector<1x32xf32>
    %227 = arith.mulf %217, %180 : vector<1x32xf32>
    %228 = arith.addf %226, %227 : vector<1x32xf32>
    %229 = tpu.concatenate %228, %201 in 1 : vector<1x32xf32>, vector<1x32xf32> -> vector<1x64xf32>
    %cst_49 = arith.constant dense<0.000000e+00> : vector<1x128xf32>
    %230 = tpu.matmul %229, %2, %cst_49 {dimension_numbers = #tpu.dot_dimension_numbers<[1], [0], [0], [1], [0, 0, 1, 1], [], []>} : vector<1x64xf32>, vector<64x128xf32>, vector<1x128xf32> -> vector<1x128xf32>
    %231 = arith.addf %230, %3 : vector<1x128xf32>
    %232 = vector.extract_strided_slice %231 {offsets = [0, 0], sizes = [1, 64], strides = [1, 1]} : vector<1x128xf32> to vector<1x64xf32>
    %233 = arith.negf %232 : vector<1x64xf32>
    %234 = math.exp %233 : vector<1x64xf32>
    %cst_50 = arith.constant 1.000000e+00 : f32
    %235 = vector.broadcast %cst_50 : f32 to vector<1x64xf32>
    %236 = arith.addf %235, %234 : vector<1x64xf32>
    %237 = arith.divf %235, %236 : vector<1x64xf32>
    %238 = vector.extract_strided_slice %237 {offsets = [0, 0], sizes = [1, 32], strides = [1, 1]} : vector<1x64xf32> to vector<1x32xf32>
    %239 = vector.extract_strided_slice %237 {offsets = [0, 32], sizes = [1, 32], strides = [1, 1]} : vector<1x64xf32> to vector<1x32xf32>
    %240 = vector.extract_strided_slice %231 {offsets = [0, 64], sizes = [1, 32], strides = [1, 1]} : vector<1x128xf32> to vector<1x32xf32>
    %241 = vector.extract_strided_slice %231 {offsets = [0, 96], sizes = [1, 32], strides = [1, 1]} : vector<1x128xf32> to vector<1x32xf32>
    %242 = arith.mulf %238, %241 : vector<1x32xf32>
    %243 = arith.addf %240, %242 : vector<1x32xf32>
    %244 = math.tanh %243 : vector<1x32xf32>
    %cst_51 = arith.constant 1.000000e+00 : f32
    %245 = vector.broadcast %cst_51 : f32 to vector<1x32xf32>
    %246 = arith.subf %245, %239 : vector<1x32xf32>
    %247 = arith.mulf %246, %244 : vector<1x32xf32>
    %248 = arith.mulf %239, %201 : vector<1x32xf32>
    %249 = arith.addf %247, %248 : vector<1x32xf32>
    %cst_52 = arith.constant 0.000000e+00 : f32
    %250 = vector.broadcast %cst_52 : f32 to vector<1x32xf32>
    %251 = arith.maximumf %249, %250 : vector<1x32xf32>
    %252 = arith.mulf %251, %4 : vector<1x32xf32>
    %253 = arith.addf %205, %252 : vector<1x32xf32>
    %254 = vector.extract_strided_slice %13 {offsets = [5, 0], sizes = [1, 96], strides = [1, 1]} : vector<8x96xf32> to vector<1x96xf32>
    %cst_53 = arith.constant dense<0.000000e+00> : vector<1x96xf32>
    %255 = tpu.matmul %228, %0, %cst_53 {dimension_numbers = #tpu.dot_dimension_numbers<[1], [0], [0], [1], [0, 0, 1, 1], [], []>} : vector<1x32xf32>, vector<32x96xf32>, vector<1x96xf32> -> vector<1x96xf32>
    %256 = vector.extract_strided_slice %254 {offsets = [0, 0], sizes = [1, 64], strides = [1, 1]} : vector<1x96xf32> to vector<1x64xf32>
    %257 = vector.extract_strided_slice %255 {offsets = [0, 0], sizes = [1, 64], strides = [1, 1]} : vector<1x96xf32> to vector<1x64xf32>
    %258 = arith.addf %256, %257 : vector<1x64xf32>
    %259 = arith.negf %258 : vector<1x64xf32>
    %260 = math.exp %259 : vector<1x64xf32>
    %cst_54 = arith.constant 1.000000e+00 : f32
    %261 = vector.broadcast %cst_54 : f32 to vector<1x64xf32>
    %262 = arith.addf %261, %260 : vector<1x64xf32>
    %263 = arith.divf %261, %262 : vector<1x64xf32>
    %264 = vector.extract_strided_slice %263 {offsets = [0, 0], sizes = [1, 32], strides = [1, 1]} : vector<1x64xf32> to vector<1x32xf32>
    %265 = vector.extract_strided_slice %263 {offsets = [0, 32], sizes = [1, 32], strides = [1, 1]} : vector<1x64xf32> to vector<1x32xf32>
    %266 = vector.extract_strided_slice %254 {offsets = [0, 64], sizes = [1, 32], strides = [1, 1]} : vector<1x96xf32> to vector<1x32xf32>
    %267 = vector.extract_strided_slice %255 {offsets = [0, 64], sizes = [1, 32], strides = [1, 1]} : vector<1x96xf32> to vector<1x32xf32>
    %268 = arith.addf %267, %1 : vector<1x32xf32>
    %269 = arith.mulf %264, %268 : vector<1x32xf32>
    %270 = arith.addf %266, %269 : vector<1x32xf32>
    %271 = math.tanh %270 : vector<1x32xf32>
    %cst_55 = arith.constant 1.000000e+00 : f32
    %272 = vector.broadcast %cst_55 : f32 to vector<1x32xf32>
    %273 = arith.subf %272, %265 : vector<1x32xf32>
    %274 = arith.mulf %273, %271 : vector<1x32xf32>
    %275 = arith.mulf %265, %228 : vector<1x32xf32>
    %276 = arith.addf %274, %275 : vector<1x32xf32>
    %277 = tpu.concatenate %276, %249 in 1 : vector<1x32xf32>, vector<1x32xf32> -> vector<1x64xf32>
    %cst_56 = arith.constant dense<0.000000e+00> : vector<1x128xf32>
    %278 = tpu.matmul %277, %2, %cst_56 {dimension_numbers = #tpu.dot_dimension_numbers<[1], [0], [0], [1], [0, 0, 1, 1], [], []>} : vector<1x64xf32>, vector<64x128xf32>, vector<1x128xf32> -> vector<1x128xf32>
    %279 = arith.addf %278, %3 : vector<1x128xf32>
    %280 = vector.extract_strided_slice %279 {offsets = [0, 0], sizes = [1, 64], strides = [1, 1]} : vector<1x128xf32> to vector<1x64xf32>
    %281 = arith.negf %280 : vector<1x64xf32>
    %282 = math.exp %281 : vector<1x64xf32>
    %cst_57 = arith.constant 1.000000e+00 : f32
    %283 = vector.broadcast %cst_57 : f32 to vector<1x64xf32>
    %284 = arith.addf %283, %282 : vector<1x64xf32>
    %285 = arith.divf %283, %284 : vector<1x64xf32>
    %286 = vector.extract_strided_slice %285 {offsets = [0, 0], sizes = [1, 32], strides = [1, 1]} : vector<1x64xf32> to vector<1x32xf32>
    %287 = vector.extract_strided_slice %285 {offsets = [0, 32], sizes = [1, 32], strides = [1, 1]} : vector<1x64xf32> to vector<1x32xf32>
    %288 = vector.extract_strided_slice %279 {offsets = [0, 64], sizes = [1, 32], strides = [1, 1]} : vector<1x128xf32> to vector<1x32xf32>
    %289 = vector.extract_strided_slice %279 {offsets = [0, 96], sizes = [1, 32], strides = [1, 1]} : vector<1x128xf32> to vector<1x32xf32>
    %290 = arith.mulf %286, %289 : vector<1x32xf32>
    %291 = arith.addf %288, %290 : vector<1x32xf32>
    %292 = math.tanh %291 : vector<1x32xf32>
    %cst_58 = arith.constant 1.000000e+00 : f32
    %293 = vector.broadcast %cst_58 : f32 to vector<1x32xf32>
    %294 = arith.subf %293, %287 : vector<1x32xf32>
    %295 = arith.mulf %294, %292 : vector<1x32xf32>
    %296 = arith.mulf %287, %249 : vector<1x32xf32>
    %297 = arith.addf %295, %296 : vector<1x32xf32>
    %cst_59 = arith.constant 0.000000e+00 : f32
    %298 = vector.broadcast %cst_59 : f32 to vector<1x32xf32>
    %299 = arith.maximumf %297, %298 : vector<1x32xf32>
    %300 = arith.mulf %299, %4 : vector<1x32xf32>
    %301 = arith.addf %253, %300 : vector<1x32xf32>
    %302 = vector.extract_strided_slice %13 {offsets = [6, 0], sizes = [1, 96], strides = [1, 1]} : vector<8x96xf32> to vector<1x96xf32>
    %cst_60 = arith.constant dense<0.000000e+00> : vector<1x96xf32>
    %303 = tpu.matmul %276, %0, %cst_60 {dimension_numbers = #tpu.dot_dimension_numbers<[1], [0], [0], [1], [0, 0, 1, 1], [], []>} : vector<1x32xf32>, vector<32x96xf32>, vector<1x96xf32> -> vector<1x96xf32>
    %304 = vector.extract_strided_slice %302 {offsets = [0, 0], sizes = [1, 64], strides = [1, 1]} : vector<1x96xf32> to vector<1x64xf32>
    %305 = vector.extract_strided_slice %303 {offsets = [0, 0], sizes = [1, 64], strides = [1, 1]} : vector<1x96xf32> to vector<1x64xf32>
    %306 = arith.addf %304, %305 : vector<1x64xf32>
    %307 = arith.negf %306 : vector<1x64xf32>
    %308 = math.exp %307 : vector<1x64xf32>
    %cst_61 = arith.constant 1.000000e+00 : f32
    %309 = vector.broadcast %cst_61 : f32 to vector<1x64xf32>
    %310 = arith.addf %309, %308 : vector<1x64xf32>
    %311 = arith.divf %309, %310 : vector<1x64xf32>
    %312 = vector.extract_strided_slice %311 {offsets = [0, 0], sizes = [1, 32], strides = [1, 1]} : vector<1x64xf32> to vector<1x32xf32>
    %313 = vector.extract_strided_slice %311 {offsets = [0, 32], sizes = [1, 32], strides = [1, 1]} : vector<1x64xf32> to vector<1x32xf32>
    %314 = vector.extract_strided_slice %302 {offsets = [0, 64], sizes = [1, 32], strides = [1, 1]} : vector<1x96xf32> to vector<1x32xf32>
    %315 = vector.extract_strided_slice %303 {offsets = [0, 64], sizes = [1, 32], strides = [1, 1]} : vector<1x96xf32> to vector<1x32xf32>
    %316 = arith.addf %315, %1 : vector<1x32xf32>
    %317 = arith.mulf %312, %316 : vector<1x32xf32>
    %318 = arith.addf %314, %317 : vector<1x32xf32>
    %319 = math.tanh %318 : vector<1x32xf32>
    %cst_62 = arith.constant 1.000000e+00 : f32
    %320 = vector.broadcast %cst_62 : f32 to vector<1x32xf32>
    %321 = arith.subf %320, %313 : vector<1x32xf32>
    %322 = arith.mulf %321, %319 : vector<1x32xf32>
    %323 = arith.mulf %313, %276 : vector<1x32xf32>
    %324 = arith.addf %322, %323 : vector<1x32xf32>
    %325 = tpu.concatenate %324, %297 in 1 : vector<1x32xf32>, vector<1x32xf32> -> vector<1x64xf32>
    %cst_63 = arith.constant dense<0.000000e+00> : vector<1x128xf32>
    %326 = tpu.matmul %325, %2, %cst_63 {dimension_numbers = #tpu.dot_dimension_numbers<[1], [0], [0], [1], [0, 0, 1, 1], [], []>} : vector<1x64xf32>, vector<64x128xf32>, vector<1x128xf32> -> vector<1x128xf32>
    %327 = arith.addf %326, %3 : vector<1x128xf32>
    %328 = vector.extract_strided_slice %327 {offsets = [0, 0], sizes = [1, 64], strides = [1, 1]} : vector<1x128xf32> to vector<1x64xf32>
    %329 = arith.negf %328 : vector<1x64xf32>
    %330 = math.exp %329 : vector<1x64xf32>
    %cst_64 = arith.constant 1.000000e+00 : f32
    %331 = vector.broadcast %cst_64 : f32 to vector<1x64xf32>
    %332 = arith.addf %331, %330 : vector<1x64xf32>
    %333 = arith.divf %331, %332 : vector<1x64xf32>
    %334 = vector.extract_strided_slice %333 {offsets = [0, 0], sizes = [1, 32], strides = [1, 1]} : vector<1x64xf32> to vector<1x32xf32>
    %335 = vector.extract_strided_slice %333 {offsets = [0, 32], sizes = [1, 32], strides = [1, 1]} : vector<1x64xf32> to vector<1x32xf32>
    %336 = vector.extract_strided_slice %327 {offsets = [0, 64], sizes = [1, 32], strides = [1, 1]} : vector<1x128xf32> to vector<1x32xf32>
    %337 = vector.extract_strided_slice %327 {offsets = [0, 96], sizes = [1, 32], strides = [1, 1]} : vector<1x128xf32> to vector<1x32xf32>
    %338 = arith.mulf %334, %337 : vector<1x32xf32>
    %339 = arith.addf %336, %338 : vector<1x32xf32>
    %340 = math.tanh %339 : vector<1x32xf32>
    %cst_65 = arith.constant 1.000000e+00 : f32
    %341 = vector.broadcast %cst_65 : f32 to vector<1x32xf32>
    %342 = arith.subf %341, %335 : vector<1x32xf32>
    %343 = arith.mulf %342, %340 : vector<1x32xf32>
    %344 = arith.mulf %335, %297 : vector<1x32xf32>
    %345 = arith.addf %343, %344 : vector<1x32xf32>
    %cst_66 = arith.constant 0.000000e+00 : f32
    %346 = vector.broadcast %cst_66 : f32 to vector<1x32xf32>
    %347 = arith.maximumf %345, %346 : vector<1x32xf32>
    %348 = arith.mulf %347, %4 : vector<1x32xf32>
    %349 = arith.addf %301, %348 : vector<1x32xf32>
    %350 = vector.extract_strided_slice %13 {offsets = [7, 0], sizes = [1, 96], strides = [1, 1]} : vector<8x96xf32> to vector<1x96xf32>
    %cst_67 = arith.constant dense<0.000000e+00> : vector<1x96xf32>
    %351 = tpu.matmul %324, %0, %cst_67 {dimension_numbers = #tpu.dot_dimension_numbers<[1], [0], [0], [1], [0, 0, 1, 1], [], []>} : vector<1x32xf32>, vector<32x96xf32>, vector<1x96xf32> -> vector<1x96xf32>
    %352 = vector.extract_strided_slice %350 {offsets = [0, 0], sizes = [1, 64], strides = [1, 1]} : vector<1x96xf32> to vector<1x64xf32>
    %353 = vector.extract_strided_slice %351 {offsets = [0, 0], sizes = [1, 64], strides = [1, 1]} : vector<1x96xf32> to vector<1x64xf32>
    %354 = arith.addf %352, %353 : vector<1x64xf32>
    %355 = arith.negf %354 : vector<1x64xf32>
    %356 = math.exp %355 : vector<1x64xf32>
    %cst_68 = arith.constant 1.000000e+00 : f32
    %357 = vector.broadcast %cst_68 : f32 to vector<1x64xf32>
    %358 = arith.addf %357, %356 : vector<1x64xf32>
    %359 = arith.divf %357, %358 : vector<1x64xf32>
    %360 = vector.extract_strided_slice %359 {offsets = [0, 0], sizes = [1, 32], strides = [1, 1]} : vector<1x64xf32> to vector<1x32xf32>
    %361 = vector.extract_strided_slice %359 {offsets = [0, 32], sizes = [1, 32], strides = [1, 1]} : vector<1x64xf32> to vector<1x32xf32>
    %362 = vector.extract_strided_slice %350 {offsets = [0, 64], sizes = [1, 32], strides = [1, 1]} : vector<1x96xf32> to vector<1x32xf32>
    %363 = vector.extract_strided_slice %351 {offsets = [0, 64], sizes = [1, 32], strides = [1, 1]} : vector<1x96xf32> to vector<1x32xf32>
    %364 = arith.addf %363, %1 : vector<1x32xf32>
    %365 = arith.mulf %360, %364 : vector<1x32xf32>
    %366 = arith.addf %362, %365 : vector<1x32xf32>
    %367 = math.tanh %366 : vector<1x32xf32>
    %cst_69 = arith.constant 1.000000e+00 : f32
    %368 = vector.broadcast %cst_69 : f32 to vector<1x32xf32>
    %369 = arith.subf %368, %361 : vector<1x32xf32>
    %370 = arith.mulf %369, %367 : vector<1x32xf32>
    %371 = arith.mulf %361, %324 : vector<1x32xf32>
    %372 = arith.addf %370, %371 : vector<1x32xf32>
    %373 = tpu.concatenate %372, %345 in 1 : vector<1x32xf32>, vector<1x32xf32> -> vector<1x64xf32>
    %cst_70 = arith.constant dense<0.000000e+00> : vector<1x128xf32>
    %374 = tpu.matmul %373, %2, %cst_70 {dimension_numbers = #tpu.dot_dimension_numbers<[1], [0], [0], [1], [0, 0, 1, 1], [], []>} : vector<1x64xf32>, vector<64x128xf32>, vector<1x128xf32> -> vector<1x128xf32>
    %375 = arith.addf %374, %3 : vector<1x128xf32>
    %376 = vector.extract_strided_slice %375 {offsets = [0, 0], sizes = [1, 64], strides = [1, 1]} : vector<1x128xf32> to vector<1x64xf32>
    %377 = arith.negf %376 : vector<1x64xf32>
    %378 = math.exp %377 : vector<1x64xf32>
    %cst_71 = arith.constant 1.000000e+00 : f32
    %379 = vector.broadcast %cst_71 : f32 to vector<1x64xf32>
    %380 = arith.addf %379, %378 : vector<1x64xf32>
    %381 = arith.divf %379, %380 : vector<1x64xf32>
    %382 = vector.extract_strided_slice %381 {offsets = [0, 0], sizes = [1, 32], strides = [1, 1]} : vector<1x64xf32> to vector<1x32xf32>
    %383 = vector.extract_strided_slice %381 {offsets = [0, 32], sizes = [1, 32], strides = [1, 1]} : vector<1x64xf32> to vector<1x32xf32>
    %384 = vector.extract_strided_slice %375 {offsets = [0, 64], sizes = [1, 32], strides = [1, 1]} : vector<1x128xf32> to vector<1x32xf32>
    %385 = vector.extract_strided_slice %375 {offsets = [0, 96], sizes = [1, 32], strides = [1, 1]} : vector<1x128xf32> to vector<1x32xf32>
    %386 = arith.mulf %382, %385 : vector<1x32xf32>
    %387 = arith.addf %384, %386 : vector<1x32xf32>
    %388 = math.tanh %387 : vector<1x32xf32>
    %cst_72 = arith.constant 1.000000e+00 : f32
    %389 = vector.broadcast %cst_72 : f32 to vector<1x32xf32>
    %390 = arith.subf %389, %383 : vector<1x32xf32>
    %391 = arith.mulf %390, %388 : vector<1x32xf32>
    %392 = arith.mulf %383, %345 : vector<1x32xf32>
    %393 = arith.addf %391, %392 : vector<1x32xf32>
    %cst_73 = arith.constant 0.000000e+00 : f32
    %394 = vector.broadcast %cst_73 : f32 to vector<1x32xf32>
    %395 = arith.maximumf %393, %394 : vector<1x32xf32>
    %396 = arith.mulf %395, %4 : vector<1x32xf32>
    %397 = arith.addf %349, %396 : vector<1x32xf32>
    %398 = vector.shape_cast %397 : vector<1x32xf32> to vector<1x1x32xf32>
    %cst_74 = arith.constant dense<0.000000e+00> : vector<1xf32>
    %399 = vector.multi_reduction <add>, %398, %cst_74 [1, 2] : vector<1x1x32xf32> to vector<1xf32>
    %400 = vector.shape_cast %399 : vector<1xf32> to vector<1x1x1xf32>
    %401 = vector.extract %400[0, 0, 0] : f32 from vector<1x1x1xf32>
    %c0_75 = arith.constant 0 : index
    %402 = memref.load %arg8[%c0_75] : memref<1xf32, #tpu.memory_space<smem>>
    %cst_76 = arith.constant 8.000000e+00 : f32
    %403 = arith.mulf %cst_76, %402 : f32
    %404 = arith.addf %401, %403 : f32
    %405 = vector.broadcast %404 : f32 to vector<1x1xf32>
    %c0_77 = arith.constant 0 : index
    %c0_78 = arith.constant 0 : index
    %406 = vector.load %arg9[%c0_77, %c0_78] : memref<1x1xf32, #tpu.memory_space<vmem>>, vector<1x1xf32>
    tpu.vector_store %arg9[%c0_77, %c0_78], %405 {strides = array<i32>} : memref<1x1xf32, #tpu.memory_space<vmem>>, vector<1x1xf32>,
    return
  }
}

</mosaic_0001>

<llo_original>
// kernel: tpu_custom_call.1
$region0: #{tpu_custom_call.1}
  #allocation0 [shape = 'u32[]', space=smem, size = 0x4, offset = 0x4, fixed_abs, tag = 'smem constant byte address 0x4 - core index']
  #allocation1 [shape = 'u32[72,128]{1,0:T(1,128)}', space=vmem, size = 0x9000, scoped, tag = 'internal scratch']
  #allocation2 [shape = 'f32[8,96]{1,0:T(8,128)}', space=vmem, size = 0x1000, scoped, tag = 'scratch operand']
  #allocation3 [shape = 'f32[1]{0:T(128)S(6)}', space=smem, size = 0x200, scoped, tag = 'scoped memory for tpu_custom_call.1']
  %s0 = inlined_call_operand.hbm [shape: f32[8,16], index: 0, kind: input, shape index: {}]
  %s1 = inlined_call_operand.hbm [shape: f32[16,96], index: 1, kind: input, shape index: {}]
  %s2 = inlined_call_operand.hbm [shape: f32[32,96], index: 2, kind: input, shape index: {}]
  %s3 = inlined_call_operand.vmem [shape: f32[1,96], index: 3, kind: input, shape index: {}]
  %s4 = inlined_call_operand.vmem [shape: f32[1,32], index: 4, kind: input, shape index: {}]
  %s5 = inlined_call_operand.hbm [shape: f32[64,128], index: 5, kind: input, shape index: {}]
  %s6 = inlined_call_operand.vmem [shape: f32[1,128], index: 6, kind: input, shape index: {}]
  %s7 = inlined_call_operand.vmem [shape: f32[1,32], index: 7, kind: input, shape index: {}]
  %s8 = inlined_call_operand.<no memory space> [shape: f32[1], index: 8, kind: input, shape index: {}]
  %s9 = inlined_call_operand.hbm [shape: f32[1,1], index: 9, kind: output, shape index: {}]
  %s10 = sld [smem:[#allocation0]]
  $region62: #{tpu_custom_call.1} parent=0
    _
  %s12 = ssub.s32 1, %s10
  %s13 = scalar_select 0, %s12, %s10
  %14 = sst [smem:[#allocation3]] %s8
  $region1: #{tpu_custom_call.1} parent=0
    #allocation4 [shape = 'u8[4096]{0}', space=vmem, size = 0x1000, scoped, tag = 'input window, operand 0, single buffered']
    #allocation5 [shape = 's32[1]{0}', space=sflag, size = 0x4, scoped, tag = 'scoped memory for tpu_custom_call.1']
    #allocation6 [shape = 's32[1]{0}', space=sflag, size = 0x4, scoped, tag = 'scoped memory for tpu_custom_call.1']
    #allocation7 [shape = 'u8[8192]{0}', space=vmem, size = 0x2000, scoped, tag = 'input window, operand 1, single buffered']
    #allocation8 [shape = 's32[1]{0}', space=sflag, size = 0x4, scoped, tag = 'scoped memory for tpu_custom_call.1']
    #allocation9 [shape = 'u8[16384]{0}', space=vmem, size = 0x4000, scoped, tag = 'input window, operand 2, single buffered']
    #allocation10 [shape = 'u8[32768]{0}', space=vmem, size = 0x8000, scoped, tag = 'input window, operand 5, single buffered']
    #allocation11 [shape = 's32[1]{0}', space=sflag, size = 0x4, scoped, tag = 'scoped memory for tpu_custom_call.1']
    #allocation12 [shape = 'u8[512]{0}', space=vmem, size = 0x400, scoped, tag = 'output window, operand 0, single buffered']
    %15 = vsyncpa [#allocation5], 0
    %16 = vsyncpa [#allocation8], 0
    %17 = vsyncpa [#allocation11], 0
    %18 = vsyncpa [#allocation6], 0
    // Predicated region
    $region2: #{tpu_custom_call.1} parent=1 // pred_check
      _
    $region3: #{tpu_custom_call.1} parent=1 // pred_check_branch
      %20 = sbr.rel (0) target = $region5
    $region4: #{tpu_custom_call.1} parent=1 // pred_region
      %22 = vsyncadd [#allocation5], 0
      %s24 = sshll.u32 %s0, 4
      %s25 = int_to_ptr.hbm [resolvable:$true] %s24
      %s26 = sshll.u32 [#allocation4], 4
      %s27 = int_to_ptr.vmem [resolvable:$true] %s26
      %29 = dma.hbm_to_vmem [thread:$0]  %s25, 128, %s27, [#allocation5]
    $region5: #{tpu_custom_call.1} parent=1 // pred_fallthru
      _
    // Predicated region
    $region6: #{tpu_custom_call.1} parent=1 // pred_check
      _
    $region7: #{tpu_custom_call.1} parent=1 // pred_check_branch
      %31 = sbr.rel (0) target = $region9
    $region8: #{tpu_custom_call.1} parent=1 // pred_region
      %33 = vsyncadd [#allocation8], 0
      %s34 = sshll.u32 %s1, 4
      %s35 = int_to_ptr.hbm [resolvable:$true] %s34
      %s36 = sshll.u32 [#allocation7], 4
      %s37 = int_to_ptr.vmem [resolvable:$true] %s36
      %42 = dma.hbm_to_vmem [thread:$0]  %s35, 256, %s37, [#allocation8], 128, 128, 8
    $region9: #{tpu_custom_call.1} parent=1 // pred_fallthru
      _
    // Predicated region
    $region10: #{tpu_custom_call.1} parent=1 // pred_check
      _
    $region11: #{tpu_custom_call.1} parent=1 // pred_check_branch
      %44 = sbr.rel (0) target = $region13
    $region12: #{tpu_custom_call.1} parent=1 // pred_region
      %46 = vsyncadd [#allocation8], 0
      %s47 = sshll.u32 %s2, 4
      %s48 = int_to_ptr.hbm [resolvable:$true] %s47
      %s49 = sshll.u32 [#allocation9], 4
      %s50 = int_to_ptr.vmem [resolvable:$true] %s49
      %55 = dma.hbm_to_vmem [thread:$0]  %s48, 512, %s50, [#allocation8], 128, 128, 8
    $region13: #{tpu_custom_call.1} parent=1 // pred_fallthru
      _
    // Predicated region
    $region14: #{tpu_custom_call.1} parent=1 // pred_check
      _
    $region15: #{tpu_custom_call.1} parent=1 // pred_check_branch
      %57 = sbr.rel (0) target = $region17
    $region16: #{tpu_custom_call.1} parent=1 // pred_region
      _
    $region17: #{tpu_custom_call.1} parent=1 // pred_fallthru
      _
    // Predicated region
    $region18: #{tpu_custom_call.1} parent=1 // pred_check
      _
    $region19: #{tpu_custom_call.1} parent=1 // pred_check_branch
      %59 = sbr.rel (0) target = $region21
    $region20: #{tpu_custom_call.1} parent=1 // pred_region
      _
    $region21: #{tpu_custom_call.1} parent=1 // pred_fallthru
      _
    // Predicated region
    $region22: #{tpu_custom_call.1} parent=1 // pred_check
      _
    $region23: #{tpu_custom_call.1} parent=1 // pred_check_branch
      %61 = sbr.rel (0) target = $region25
    $region24: #{tpu_custom_call.1} parent=1 // pred_region
      %63 = vsyncadd [#allocation11], 0
      %s64 = sshll.u32 %s5, 4
      %s65 = int_to_ptr.hbm [resolvable:$true] %s64
      %s66 = sshll.u32 [#allocation10], 4
      %s67 = int_to_ptr.vmem [resolvable:$true] %s66
      %72 = dma.hbm_to_vmem [thread:$0]  %s65, 1024, %s67, [#allocation11], 128, 128, 8
    $region25: #{tpu_custom_call.1} parent=1 // pred_fallthru
      _
    // Predicated region
    $region26: #{tpu_custom_call.1} parent=1 // pred_check
      _
    $region27: #{tpu_custom_call.1} parent=1 // pred_check_branch
      %74 = sbr.rel (0) target = $region29
    $region28: #{tpu_custom_call.1} parent=1 // pred_region
      _
    $region29: #{tpu_custom_call.1} parent=1 // pred_fallthru
      _
    // Predicated region
    $region30: #{tpu_custom_call.1} parent=1 // pred_check
      _
    $region31: #{tpu_custom_call.1} parent=1 // pred_check_branch
      %76 = sbr.rel (0) target = $region33
    $region32: #{tpu_custom_call.1} parent=1 // pred_region
      _
    $region33: #{tpu_custom_call.1} parent=1 // pred_fallthru
      _
    // Predicated region
    $region34: #{tpu_custom_call.1} parent=1 // pred_check
      _
    $region35: #{tpu_custom_call.1} parent=1 // pred_check_branch
      %78 = sbr.rel (0) target = $region37
    $region36: #{tpu_custom_call.1} parent=1 // pred_region
      _
    $region37: #{tpu_custom_call.1} parent=1 // pred_fallthru
      _
    // Predicated region
    $region38: #{tpu_custom_call.1} parent=1 // pred_check
      _
    $region39: #{tpu_custom_call.1} parent=1 // pred_check_branch
      %80 = sbr.rel (0) target = $region41
    $region40: #{tpu_custom_call.1} parent=1 // pred_region
      %82 = dma.done [#allocation5], 128
    $region41: #{tpu_custom_call.1} parent=1 // pred_fallthru
      _
    // Predicated region
    $region42: #{tpu_custom_call.1} parent=1 // pred_check
      _
    $region43: #{tpu_custom_call.1} parent=1 // pred_check_branch
      %84 = sbr.rel (0) target = $region45
    $region44: #{tpu_custom_call.1} parent=1 // pred_region
      %86 = dma.done [#allocation8], 256
    $region45: #{tpu_custom_call.1} parent=1 // pred_fallthru
      _
    // Predicated region
    $region46: #{tpu_custom_call.1} parent=1 // pred_check
      _
    $region47: #{tpu_custom_call.1} parent=1 // pred_check_branch
      %88 = sbr.rel (0) target = $region49
    $region48: #{tpu_custom_call.1} parent=1 // pred_region
      %90 = dma.done [#allocation8], 512
    $region49: #{tpu_custom_call.1} parent=1 // pred_fallthru
      _
    // Predicated region
    $region50: #{tpu_custom_call.1} parent=1 // pred_check
      _
    $region51: #{tpu_custom_call.1} parent=1 // pred_check_branch
      %92 = sbr.rel (0) target = $region53
    $region52: #{tpu_custom_call.1} parent=1 // pred_region
      %94 = dma.done [#allocation11], 1024
    $region53: #{tpu_custom_call.1} parent=1 // pred_fallthru
      _
    %v95 = vld [vmem:[#allocation9] sm:$0xff]
    %v96 = vld [vmem:[#allocation9 + $0x8] sm:$0xff]
    %v97 = vld [vmem:[#allocation9 + $0x10] sm:$0xff]
    %v98 = vld [vmem:[#allocation9 + $0x18] sm:$0xff]
    %v99 = vld [vmem:[%s4] sm:$0x1]
    %v100 = vld [vmem:[#allocation10] sm:$0xff]
    %v101 = vld [vmem:[#allocation10 + $0x8] sm:$0xff]
    %v102 = vld [vmem:[#allocation10 + $0x10] sm:$0xff]
    %v103 = vld [vmem:[#allocation10 + $0x18] sm:$0xff]
    %v104 = vld [vmem:[#allocation10 + $0x20] sm:$0xff]
    %v105 = vld [vmem:[#allocation10 + $0x28] sm:$0xff]
    %v106 = vld [vmem:[#allocation10 + $0x30] sm:$0xff]
    %v107 = vld [vmem:[#allocation10 + $0x38] sm:$0xff]
    %v108 = vld [vmem:[%s6] sm:$0x1]
    %v109 = vld [vmem:[%s7] sm:$0x1]
    %v110 = vld [vmem:[#allocation4] sm:$0xff]
    %v111 = vld [vmem:[#allocation7] sm:$0xff]
    %v112 = vld [vmem:[#allocation7 + $0x8] sm:$0xff]
    %v113 = vld [vmem:[%s3] sm:$0x1]
    %v115 = vperm.slane %v113, 0
    %vm117 = vcmask 130048
    %v119 = vsel %vm117, %v110, 0
    %121 = vmatpush.msra.mxu0 0.0
    %122 = vmatpush.msra.mxu0 0.0
    %123 = vmatpush.msra.mxu0 0.0
    %124 = vmatpush.msra.mxu0 0.0
    %125 = vmatpush.msra.mxu0 0.0
    %126 = vmatpush.msra.mxu0 0.0
    %127 = vmatpush.msra.mxu0 0.0
    %128 = vmatpush.msra.mxu0 0.0
    %129 = vmatpush.msra.mxu0 0.0
    %130 = vmatpush.msra.mxu0 0.0
    %131 = vmatpush.msra.mxu0 0.0
    %132 = vmatpush.msra.mxu0 0.0
    %133 = vmatpush.msra.mxu0 0.0
    %134 = vmatpush.msra.mxu0 0.0
    %135 = vmatpush.msra.mxu0 %v112
    %136 = vmatpush.msra.mxu0 %v111
    %137 = vmatmul.f32.gmra.mxu0 %v119
    %v138 = vpop.f32.mrf.mxu0
    %v139 = vadd.f32 %v115, %v138
    %140 = vdwg.mxu0
    %vm141 = vcmask 261120
    %v143 = vsel %vm141, 0.0, 0
    %145 = vmatpush.msra.mxu0 0.0
    %146 = vmatpush.msra.mxu0 0.0
    %147 = vmatpush.msra.mxu0 0.0
    %148 = vmatpush.msra.mxu0 0.0
    %149 = vmatpush.msra.mxu0 0.0
    %150 = vmatpush.msra.mxu0 0.0
    %151 = vmatpush.msra.mxu0 0.0
    %152 = vmatpush.msra.mxu0 0.0
    %153 = vmatpush.msra.mxu0 0.0
    %154 = vmatpush.msra.mxu0 0.0
    %155 = vmatpush.msra.mxu0 0.0
    %156 = vmatpush.msra.mxu0 0.0
    %157 = vmatpush.msra.mxu0 %v98
    %158 = vmatpush.msra.mxu0 %v97
    %159 = vmatpush.msra.mxu0 %v96
    %160 = vmatpush.msra.mxu0 %v95
    %161 = vmatmul.f32.gmra.mxu0 %v143
    %v162 = vpop.f32.mrf.mxu0
    %v163 = vadd.f32 0.0, %v162
    %164 = vdwg.mxu0
    %v165 = vadd.f32 %v139, %v163
    %v166 = vxor.u32 %v165, 2147483648
    %v167 = vmul.f32 %v166, 1.442695
    %v168 = vpow.pop %v167
    %v169 = vadd.f32 %v168, 1.0
    %v170 = vrcp.pop %v169
    %v171 = vmul.f32 %v169, %v170
    %v172 = vsub.f32 1.0, %v171
    %v173 = vmul.f32 %v170, %v172
    %v174 = vadd.f32 %v170, %v173
    %vm175 = vweird.f32 %v169
    %vm176 = vweird.f32 %v170
    %vm177 = vmor %vm175, %vm176
    %v178 = vsel %vm177, %v170, %v174
    %v179 = vand.u32 2147483647, %v169
    %vm180 = vcmp.eq.f32.partialorder %v179, 8.507059e+37
    %v181 = vand.u32 %v169, 2147483648
    %v182 = vor.u32 1.1754944e-38, %v181
    %v183 = vsel %vm180, %v182, %v178
    %v184 = vmul.f32 1.0, %v183
    %v186 = vperm.slane %v99, 0
    %187 = vrot.lane.b32.xlu0 %v186, 64
    %v188 = vpop.permute.xlu0 %187
    %v190 = vadd.f32 %v163, %v188
    %192 = vrot.lane.b32.xlu0 %v190, 64
    %v193 = vpop.permute.xlu0 %192
    %v195 = vmul.f32 %v184, %v193
    %197 = vrot.lane.b32.xlu0 %v195, 64
    %v198 = vpop.permute.xlu0 %197
    %v200 = vadd.f32 %v139, %v198
    %v201 = vtanh.pop %v200
    %v202 = vsub.f32 1.0, %v184
    %204 = vrot.lane.b32.xlu0 %v201, 96
    %v205 = vpop.permute.xlu0 %204
    %v207 = vmul.f32 %v202, %v205
    %v208 = vmul.f32 %v184, 0.0
    %v209 = vadd.f32 %v207, %v208
    %211 = vrot.lane.b32.xlu0 %v209, 96
    %v212 = vpop.permute.xlu0 %211
    %v214 = vsel %vm141, %v212, 0.0
    %vm215 = vcmask 523264
    %v217 = vsel %vm215, %v214, 0
    %219 = vmatpush.msra.mxu0 0.0
    %220 = vmatpush.msra.mxu0 0.0
    %221 = vmatpush.msra.mxu0 0.0
    %222 = vmatpush.msra.mxu0 0.0
    %223 = vmatpush.msra.mxu0 0.0
    %224 = vmatpush.msra.mxu0 0.0
    %225 = vmatpush.msra.mxu0 0.0
    %226 = vmatpush.msra.mxu0 0.0
    %227 = vmatpush.msra.mxu0 %v107
    %228 = vmatpush.msra.mxu0 %v106
    %229 = vmatpush.msra.mxu0 %v105
    %230 = vmatpush.msra.mxu0 %v104
    %231 = vmatpush.msra.mxu0 %v103
    %232 = vmatpush.msra.mxu0 %v102
    %233 = vmatpush.msra.mxu0 %v101
    %234 = vmatpush.msra.mxu0 %v100
    %235 = vmatmul.f32.gmra.mxu0 %v217
    %v236 = vpop.f32.mrf.mxu0
    %v237 = vadd.f32 %v108, %v236
    %238 = vdwg.mxu0
    %v239 = vxor.u32 %v237, 2147483648
    %v240 = vmul.f32 %v239, 1.442695
    %v241 = vpow.pop %v240
    %v242 = vadd.f32 %v241, 1.0
    %v243 = vrcp.pop %v242
    %v244 = vmul.f32 %v242, %v243
    %v245 = vsub.f32 1.0, %v244
    %v246 = vmul.f32 %v243, %v245
    %v247 = vadd.f32 %v243, %v246
    %vm248 = vweird.f32 %v242
    %vm249 = vweird.f32 %v243
    %vm250 = vmor %vm248, %vm249
    %v251 = vsel %vm250, %v243, %v247
    %v252 = vand.u32 2147483647, %v242
    %vm253 = vcmp.eq.f32.partialorder %v252, 8.507059e+37
    %v254 = vand.u32 %v242, 2147483648
    %v255 = vor.u32 1.1754944e-38, %v254
    %v256 = vsel %vm253, %v255, %v251
    %v257 = vmul.f32 1.0, %v256
    %259 = vrot.lane.b32.xlu0 %v237, 32
    %v260 = vpop.permute.xlu0 %259
    %v262 = vmul.f32 %v257, %v260
    %264 = vrot.lane.b32.xlu0 %v262, 64
    %v265 = vpop.permute.xlu0 %264
    %v267 = vadd.f32 %v237, %v265
    %v268 = vtanh.pop %v267
    %v269 = vsub.f32 1.0, %v257
    %271 = vrot.lane.b32.xlu0 %v268, 96
    %v272 = vpop.permute.xlu0 %271
    %v274 = vmul.f32 %v269, %v272
    %v275 = vmul.f32 %v257, 0.0
    %v276 = vadd.f32 %v274, %v275
    %v277 = vmax.f32 %v276, 0.0
    %v279 = vperm.slane %v109, 0
    %280 = vrot.lane.b32.xlu0 %v279, 32
    %v281 = vpop.permute.xlu0 %280
    %v283 = vmul.f32 %v277, %v281
    %v284 = vadd.f32 %v283, 0.0
    %v285 = vsel %vm141, %v212, 0
    %287 = vmatpush.msra.mxu0 0.0
    %288 = vmatpush.msra.mxu0 0.0
    %289 = vmatpush.msra.mxu0 0.0
    %290 = vmatpush.msra.mxu0 0.0
    %291 = vmatpush.msra.mxu0 0.0
    %292 = vmatpush.msra.mxu0 0.0
    %293 = vmatpush.msra.mxu0 0.0
    %294 = vmatpush.msra.mxu0 0.0
    %295 = vmatpush.msra.mxu0 0.0
    %296 = vmatpush.msra.mxu0 0.0
    %297 = vmatpush.msra.mxu0 0.0
    %298 = vmatpush.msra.mxu0 0.0
    %299 = vmatpush.msra.mxu0 %v98
    %300 = vmatpush.msra.mxu0 %v97
    %301 = vmatpush.msra.mxu0 %v96
    %302 = vmatpush.msra.mxu0 %v95
    %303 = vmatmul.f32.gmra.mxu0 %v285
    %v304 = vpop.f32.mrf.mxu0
    %v305 = vadd.f32 0.0, %v304
    %306 = vdwg.mxu0
    %v308 = vrot.slane %v305, 7
    %v310 = vadd.f32 %v139, %v308
    %v311 = vxor.u32 %v310, 2147483648
    %v312 = vmul.f32 %v311, 1.442695
    %v313 = vpow.pop %v312
    %v314 = vadd.f32 %v313, 1.0
    %v315 = vrcp.pop %v314
    %v316 = vmul.f32 %v314, %v315
    %v317 = vsub.f32 1.0, %v316
    %v318 = vmul.f32 %v315, %v317
    %v319 = vadd.f32 %v315, %v318
    %vm320 = vweird.f32 %v314
    %vm321 = vweird.f32 %v315
    %vm322 = vmor %vm320, %vm321
    %v323 = vsel %vm322, %v315, %v319
    %v324 = vand.u32 2147483647, %v314
    %vm325 = vcmp.eq.f32.partialorder %v324, 8.507059e+37
    %v326 = vand.u32 %v314, 2147483648
    %v327 = vor.u32 1.1754944e-38, %v326
    %v328 = vsel %vm325, %v327, %v323
    %v329 = vmul.f32 1.0, %v328
    %v330 = vadd.f32 %v305, %v188
    %v332 = vrot.slane %v330, 7
    %333 = vrot.lane.b32.xlu0 %v332, 64
    %v334 = vpop.permute.xlu0 %333
    %v336 = vmul.f32 %v329, %v334
    %338 = vrot.lane.b32.xlu0 %v336, 64
    %v339 = vpop.permute.xlu0 %338
    %v341 = vadd.f32 %v139, %v339
    %v342 = vtanh.pop %v341
    %v343 = vsub.f32 1.0, %v329
    %345 = vrot.lane.b32.xlu0 %v342, 96
    %v346 = vpop.permute.xlu0 %345
    %v348 = vmul.f32 %v343, %v346
    %v349 = vrot.slane %v209, 7
    %v351 = vmul.f32 %v329, %v349
    %v352 = vadd.f32 %v348, %v351
    %354 = vrot.lane.b32.xlu0 %v352, 96
    %v355 = vpop.permute.xlu0 %354
    %v358 = vrot.slane %v276, 7
    %v360 = vsel %vm141, %v355, %v358
    %v362 = vrot.slane %v360, 1
    %v363 = vsel %vm215, %v362, 0
    %365 = vmatpush.msra.mxu0 0.0
    %366 = vmatpush.msra.mxu0 0.0
    %367 = vmatpush.msra.mxu0 0.0
    %368 = vmatpush.msra.mxu0 0.0
    %369 = vmatpush.msra.mxu0 0.0
    %370 = vmatpush.msra.mxu0 0.0
    %371 = vmatpush.msra.mxu0 0.0
    %372 = vmatpush.msra.mxu0 0.0
    %373 = vmatpush.msra.mxu0 %v107
    %374 = vmatpush.msra.mxu0 %v106
    %375 = vmatpush.msra.mxu0 %v105
    %376 = vmatpush.msra.mxu0 %v104
    %377 = vmatpush.msra.mxu0 %v103
    %378 = vmatpush.msra.mxu0 %v102
    %379 = vmatpush.msra.mxu0 %v101
    %380 = vmatpush.msra.mxu0 %v100
    %381 = vmatmul.f32.gmra.mxu0 %v363
    %v382 = vpop.f32.mrf.mxu0
    %v383 = vadd.f32 %v108, %v382
    %384 = vdwg.mxu0
    %v385 = vxor.u32 %v383, 2147483648
    %v386 = vmul.f32 %v385, 1.442695
    %v387 = vpow.pop %v386
    %v388 = vadd.f32 %v387, 1.0
    %v389 = vrcp.pop %v388
    %v390 = vmul.f32 %v388, %v389
    %v391 = vsub.f32 1.0, %v390
    %v392 = vmul.f32 %v389, %v391
    %v393 = vadd.f32 %v389, %v392
    %vm394 = vweird.f32 %v388
    %vm395 = vweird.f32 %v389
    %vm396 = vmor %vm394, %vm395
    %v397 = vsel %vm396, %v389, %v393
    %v398 = vand.u32 2147483647, %v388
    %vm399 = vcmp.eq.f32.partialorder %v398, 8.507059e+37
    %v400 = vand.u32 %v388, 2147483648
    %v401 = vor.u32 1.1754944e-38, %v400
    %v402 = vsel %vm399, %v401, %v397
    %v403 = vmul.f32 1.0, %v402
    %405 = vrot.lane.b32.xlu0 %v383, 32
    %v406 = vpop.permute.xlu0 %405
    %v408 = vmul.f32 %v403, %v406
    %410 = vrot.lane.b32.xlu0 %v408, 64
    %v411 = vpop.permute.xlu0 %410
    %v413 = vadd.f32 %v383, %v411
    %v414 = vtanh.pop %v413
    %v415 = vsub.f32 1.0, %v403
    %417 = vrot.lane.b32.xlu0 %v414, 96
    %v418 = vpop.permute.xlu0 %417
    %v420 = vmul.f32 %v415, %v418
    %v421 = vmul.f32 %v403, %v276
    %v422 = vadd.f32 %v420, %v421
    %v423 = vmax.f32 %v422, 0.0
    %v424 = vmul.f32 %v423, %v281
    %v425 = vadd.f32 %v284, %v424
    %v426 = vrot.slane %v352, 1
    %427 = vrot.lane.b32.xlu0 %v426, 96
    %v428 = vpop.permute.xlu0 %427
    %v429 = vsel %vm141, %v428, 0
    %431 = vmatpush.msra.mxu0 0.0
    %432 = vmatpush.msra.mxu0 0.0
    %433 = vmatpush.msra.mxu0 0.0
    %434 = vmatpush.msra.mxu0 0.0
    %435 = vmatpush.msra.mxu0 0.0
    %436 = vmatpush.msra.mxu0 0.0
    %437 = vmatpush.msra.mxu0 0.0
    %438 = vmatpush.msra.mxu0 0.0
    %439 = vmatpush.msra.mxu0 0.0
    %440 = vmatpush.msra.mxu0 0.0
    %441 = vmatpush.msra.mxu0 0.0
    %442 = vmatpush.msra.mxu0 0.0
    %443 = vmatpush.msra.mxu0 %v98
    %444 = vmatpush.msra.mxu0 %v97
    %445 = vmatpush.msra.mxu0 %v96
    %446 = vmatpush.msra.mxu0 %v95
    %447 = vmatmul.f32.gmra.mxu0 %v429
    %v448 = vpop.f32.mrf.mxu0
    %v449 = vadd.f32 0.0, %v448
    %450 = vdwg.mxu0
    %v452 = vrot.slane %v449, 6
    %v454 = vadd.f32 %v139, %v452
    %v455 = vxor.u32 %v454, 2147483648
    %v456 = vmul.f32 %v455, 1.442695
    %v457 = vpow.pop %v456
    %v458 = vadd.f32 %v457, 1.0
    %v459 = vrcp.pop %v458
    %v460 = vmul.f32 %v458, %v459
    %v461 = vsub.f32 1.0, %v460
    %v462 = vmul.f32 %v459, %v461
    %v463 = vadd.f32 %v459, %v462
    %vm464 = vweird.f32 %v458
    %vm465 = vweird.f32 %v459
    %vm466 = vmor %vm464, %vm465
    %v467 = vsel %vm466, %v459, %v463
    %v468 = vand.u32 2147483647, %v458
    %vm469 = vcmp.eq.f32.partialorder %v468, 8.507059e+37
    %v470 = vand.u32 %v458, 2147483648
    %v471 = vor.u32 1.1754944e-38, %v470
    %v472 = vsel %vm469, %v471, %v467
    %v473 = vmul.f32 1.0, %v472
    %v474 = vadd.f32 %v449, %v188
    %v476 = vrot.slane %v474, 6
    %477 = vrot.lane.b32.xlu0 %v476, 64
    %v478 = vpop.permute.xlu0 %477
    %v480 = vmul.f32 %v473, %v478
    %482 = vrot.lane.b32.xlu0 %v480, 64
    %v483 = vpop.permute.xlu0 %482
    %v485 = vadd.f32 %v139, %v483
    %v486 = vtanh.pop %v485
    %v487 = vsub.f32 1.0, %v473
    %489 = vrot.lane.b32.xlu0 %v486, 96
    %v490 = vpop.permute.xlu0 %489
    %v492 = vmul.f32 %v487, %v490
    %v493 = vrot.slane %v352, 7
    %v495 = vmul.f32 %v473, %v493
    %v496 = vadd.f32 %v492, %v495
    %498 = vrot.lane.b32.xlu0 %v496, 96
    %v499 = vpop.permute.xlu0 %498
    %v502 = vrot.slane %v422, 6
    %v504 = vsel %vm141, %v499, %v502
    %v506 = vrot.slane %v504, 2
    %v507 = vsel %vm215, %v506, 0
    %509 = vmatpush.msra.mxu0 0.0
    %510 = vmatpush.msra.mxu0 0.0
    %511 = vmatpush.msra.mxu0 0.0
    %512 = vmatpush.msra.mxu0 0.0
    %513 = vmatpush.msra.mxu0 0.0
    %514 = vmatpush.msra.mxu0 0.0
    %515 = vmatpush.msra.mxu0 0.0
    %516 = vmatpush.msra.mxu0 0.0
    %517 = vmatpush.msra.mxu0 %v107
    %518 = vmatpush.msra.mxu0 %v106
    %519 = vmatpush.msra.mxu0 %v105
    %520 = vmatpush.msra.mxu0 %v104
    %521 = vmatpush.msra.mxu0 %v103
    %522 = vmatpush.msra.mxu0 %v102
    %523 = vmatpush.msra.mxu0 %v101
    %524 = vmatpush.msra.mxu0 %v100
    %525 = vmatmul.f32.gmra.mxu0 %v507
    %v526 = vpop.f32.mrf.mxu0
    %v527 = vadd.f32 %v108, %v526
    %528 = vdwg.mxu0
    %v529 = vxor.u32 %v527, 2147483648
    %v530 = vmul.f32 %v529, 1.442695
    %v531 = vpow.pop %v530
    %v532 = vadd.f32 %v531, 1.0
    %v533 = vrcp.pop %v532
    %v534 = vmul.f32 %v532, %v533
    %v535 = vsub.f32 1.0, %v534
    %v536 = vmul.f32 %v533, %v535
    %v537 = vadd.f32 %v533, %v536
    %vm538 = vweird.f32 %v532
    %vm539 = vweird.f32 %v533
    %vm540 = vmor %vm538, %vm539
    %v541 = vsel %vm540, %v533, %v537
    %v542 = vand.u32 2147483647, %v532
    %vm543 = vcmp.eq.f32.partialorder %v542, 8.507059e+37
    %v544 = vand.u32 %v532, 2147483648
    %v545 = vor.u32 1.1754944e-38, %v544
    %v546 = vsel %vm543, %v545, %v541
    %v547 = vmul.f32 1.0, %v546
    %549 = vrot.lane.b32.xlu0 %v527, 32
    %v550 = vpop.permute.xlu0 %549
    %v552 = vmul.f32 %v547, %v550
    %554 = vrot.lane.b32.xlu0 %v552, 64
    %v555 = vpop.permute.xlu0 %554
    %v557 = vadd.f32 %v527, %v555
    %v558 = vtanh.pop %v557
    %v559 = vsub.f32 1.0, %v547
    %561 = vrot.lane.b32.xlu0 %v558, 96
    %v562 = vpop.permute.xlu0 %561
    %v564 = vmul.f32 %v559, %v562
    %v565 = vmul.f32 %v547, %v422
    %v566 = vadd.f32 %v564, %v565
    %v567 = vmax.f32 %v566, 0.0
    %v568 = vmul.f32 %v567, %v281
    %v569 = vadd.f32 %v425, %v568
    %v570 = vrot.slane %v496, 2
    %571 = vrot.lane.b32.xlu0 %v570, 96
    %v572 = vpop.permute.xlu0 %571
    %v573 = vsel %vm141, %v572, 0
    %575 = vmatpush.msra.mxu0 0.0
    %576 = vmatpush.msra.mxu0 0.0
    %577 = vmatpush.msra.mxu0 0.0
    %578 = vmatpush.msra.mxu0 0.0
    %579 = vmatpush.msra.mxu0 0.0
    %580 = vmatpush.msra.mxu0 0.0
    %581 = vmatpush.msra.mxu0 0.0
    %582 = vmatpush.msra.mxu0 0.0
    %583 = vmatpush.msra.mxu0 0.0
    %584 = vmatpush.msra.mxu0 0.0
    %585 = vmatpush.msra.mxu0 0.0
    %586 = vmatpush.msra.mxu0 0.0
    %587 = vmatpush.msra.mxu0 %v98
    %588 = vmatpush.msra.mxu0 %v97
    %589 = vmatpush.msra.mxu0 %v96
    %590 = vmatpush.msra.mxu0 %v95
    %591 = vmatmul.f32.gmra.mxu0 %v573
    %v592 = vpop.f32.mrf.mxu0
    %v593 = vadd.f32 0.0, %v592
    %594 = vdwg.mxu0
    %v596 = vrot.slane %v593, 5
    %v598 = vadd.f32 %v139, %v596
    %v599 = vxor.u32 %v598, 2147483648
    %v600 = vmul.f32 %v599, 1.442695
    %v601 = vpow.pop %v600
    %v602 = vadd.f32 %v601, 1.0
    %v603 = vrcp.pop %v602
    %v604 = vmul.f32 %v602, %v603
    %v605 = vsub.f32 1.0, %v604
    %v606 = vmul.f32 %v603, %v605
    %v607 = vadd.f32 %v603, %v606
    %vm608 = vweird.f32 %v602
    %vm609 = vweird.f32 %v603
    %vm610 = vmor %vm608, %vm609
    %v611 = vsel %vm610, %v603, %v607
    %v612 = vand.u32 2147483647, %v602
    %vm613 = vcmp.eq.f32.partialorder %v612, 8.507059e+37
    %v614 = vand.u32 %v602, 2147483648
    %v615 = vor.u32 1.1754944e-38, %v614
    %v616 = vsel %vm613, %v615, %v611
    %v617 = vmul.f32 1.0, %v616
    %v618 = vadd.f32 %v593, %v188
    %v620 = vrot.slane %v618, 5
    %621 = vrot.lane.b32.xlu0 %v620, 64
    %v622 = vpop.permute.xlu0 %621
    %v624 = vmul.f32 %v617, %v622
    %626 = vrot.lane.b32.xlu0 %v624, 64
    %v627 = vpop.permute.xlu0 %626
    %v629 = vadd.f32 %v139, %v627
    %v630 = vtanh.pop %v629
    %v631 = vsub.f32 1.0, %v617
    %633 = vrot.lane.b32.xlu0 %v630, 96
    %v634 = vpop.permute.xlu0 %633
    %v636 = vmul.f32 %v631, %v634
    %v637 = vrot.slane %v496, 7
    %v639 = vmul.f32 %v617, %v637
    %v640 = vadd.f32 %v636, %v639
    %642 = vrot.lane.b32.xlu0 %v640, 96
    %v643 = vpop.permute.xlu0 %642
    %v646 = vrot.slane %v566, 5
    %v648 = vsel %vm141, %v643, %v646
    %v650 = vrot.slane %v648, 3
    %v651 = vsel %vm215, %v650, 0
    %653 = vmatpush.msra.mxu0 0.0
    %654 = vmatpush.msra.mxu0 0.0
    %655 = vmatpush.msra.mxu0 0.0
    %656 = vmatpush.msra.mxu0 0.0
    %657 = vmatpush.msra.mxu0 0.0
    %658 = vmatpush.msra.mxu0 0.0
    %659 = vmatpush.msra.mxu0 0.0
    %660 = vmatpush.msra.mxu0 0.0
    %661 = vmatpush.msra.mxu0 %v107
    %662 = vmatpush.msra.mxu0 %v106
    %663 = vmatpush.msra.mxu0 %v105
    %664 = vmatpush.msra.mxu0 %v104
    %665 = vmatpush.msra.mxu0 %v103
    %666 = vmatpush.msra.mxu0 %v102
    %667 = vmatpush.msra.mxu0 %v101
    %668 = vmatpush.msra.mxu0 %v100
    %669 = vmatmul.f32.gmra.mxu0 %v651
    %v670 = vpop.f32.mrf.mxu0
    %v671 = vadd.f32 %v108, %v670
    %672 = vdwg.mxu0
    %v673 = vxor.u32 %v671, 2147483648
    %v674 = vmul.f32 %v673, 1.442695
    %v675 = vpow.pop %v674
    %v676 = vadd.f32 %v675, 1.0
    %v677 = vrcp.pop %v676
    %v678 = vmul.f32 %v676, %v677
    %v679 = vsub.f32 1.0, %v678
    %v680 = vmul.f32 %v677, %v679
    %v681 = vadd.f32 %v677, %v680
    %vm682 = vweird.f32 %v676
    %vm683 = vweird.f32 %v677
    %vm684 = vmor %vm682, %vm683
    %v685 = vsel %vm684, %v677, %v681
    %v686 = vand.u32 2147483647, %v676
    %vm687 = vcmp.eq.f32.partialorder %v686, 8.507059e+37
    %v688 = vand.u32 %v676, 2147483648
    %v689 = vor.u32 1.1754944e-38, %v688
    %v690 = vsel %vm687, %v689, %v685
    %v691 = vmul.f32 1.0, %v690
    %693 = vrot.lane.b32.xlu0 %v671, 32
    %v694 = vpop.permute.xlu0 %693
    %v696 = vmul.f32 %v691, %v694
    %698 = vrot.lane.b32.xlu0 %v696, 64
    %v699 = vpop.permute.xlu0 %698
    %v701 = vadd.f32 %v671, %v699
    %v702 = vtanh.pop %v701
    %v703 = vsub.f32 1.0, %v691
    %705 = vrot.lane.b32.xlu0 %v702, 96
    %v706 = vpop.permute.xlu0 %705
    %v708 = vmul.f32 %v703, %v706
    %v709 = vmul.f32 %v691, %v566
    %v710 = vadd.f32 %v708, %v709
    %v711 = vmax.f32 %v710, 0.0
    %v712 = vmul.f32 %v711, %v281
    %v713 = vadd.f32 %v569, %v712
    %v714 = vrot.slane %v640, 3
    %715 = vrot.lane.b32.xlu0 %v714, 96
    %v716 = vpop.permute.xlu0 %715
    %v717 = vsel %vm141, %v716, 0
    %719 = vmatpush.msra.mxu0 0.0
    %720 = vmatpush.msra.mxu0 0.0
    %721 = vmatpush.msra.mxu0 0.0
    %722 = vmatpush.msra.mxu0 0.0
    %723 = vmatpush.msra.mxu0 0.0
    %724 = vmatpush.msra.mxu0 0.0
    %725 = vmatpush.msra.mxu0 0.0
    %726 = vmatpush.msra.mxu0 0.0
    %727 = vmatpush.msra.mxu0 0.0
    %728 = vmatpush.msra.mxu0 0.0
    %729 = vmatpush.msra.mxu0 0.0
    %730 = vmatpush.msra.mxu0 0.0
    %731 = vmatpush.msra.mxu0 %v98
    %732 = vmatpush.msra.mxu0 %v97
    %733 = vmatpush.msra.mxu0 %v96
    %734 = vmatpush.msra.mxu0 %v95
    %735 = vmatmul.f32.gmra.mxu0 %v717
    %v736 = vpop.f32.mrf.mxu0
    %v737 = vadd.f32 0.0, %v736
    %738 = vdwg.mxu0
    %v740 = vrot.slane %v737, 4
    %v742 = vadd.f32 %v139, %v740
    %v743 = vxor.u32 %v742, 2147483648
    %v744 = vmul.f32 %v743, 1.442695
    %v745 = vpow.pop %v744
    %v746 = vadd.f32 %v745, 1.0
    %v747 = vrcp.pop %v746
    %v748 = vmul.f32 %v746, %v747
    %v749 = vsub.f32 1.0, %v748
    %v750 = vmul.f32 %v747, %v749
    %v751 = vadd.f32 %v747, %v750
    %vm752 = vweird.f32 %v746
    %vm753 = vweird.f32 %v747
    %vm754 = vmor %vm752, %vm753
    %v755 = vsel %vm754, %v747, %v751
    %v756 = vand.u32 2147483647, %v746
    %vm757 = vcmp.eq.f32.partialorder %v756, 8.507059e+37
    %v758 = vand.u32 %v746, 2147483648
    %v759 = vor.u32 1.1754944e-38, %v758
    %v760 = vsel %vm757, %v759, %v755
    %v761 = vmul.f32 1.0, %v760
    %v762 = vadd.f32 %v737, %v188
    %v764 = vrot.slane %v762, 4
    %765 = vrot.lane.b32.xlu0 %v764, 64
    %v766 = vpop.permute.xlu0 %765
    %v768 = vmul.f32 %v761, %v766
    %770 = vrot.lane.b32.xlu0 %v768, 64
    %v771 = vpop.permute.xlu0 %770
    %v773 = vadd.f32 %v139, %v771
    %v774 = vtanh.pop %v773
    %v775 = vsub.f32 1.0, %v761
    %777 = vrot.lane.b32.xlu0 %v774, 96
    %v778 = vpop.permute.xlu0 %777
    %v780 = vmul.f32 %v775, %v778
    %v781 = vrot.slane %v640, 7
    %v783 = vmul.f32 %v761, %v781
    %v784 = vadd.f32 %v780, %v783
    %786 = vrot.lane.b32.xlu0 %v784, 96
    %v787 = vpop.permute.xlu0 %786
    %v790 = vrot.slane %v710, 4
    %v792 = vsel %vm141, %v787, %v790
    %v794 = vrot.slane %v792, 4
    %v795 = vsel %vm215, %v794, 0
    %797 = vmatpush.msra.mxu0 0.0
    %798 = vmatpush.msra.mxu0 0.0
    %799 = vmatpush.msra.mxu0 0.0
    %800 = vmatpush.msra.mxu0 0.0
    %801 = vmatpush.msra.mxu0 0.0
    %802 = vmatpush.msra.mxu0 0.0
    %803 = vmatpush.msra.mxu0 0.0
    %804 = vmatpush.msra.mxu0 0.0
    %805 = vmatpush.msra.mxu0 %v107
    %806 = vmatpush.msra.mxu0 %v106
    %807 = vmatpush.msra.mxu0 %v105
    %808 = vmatpush.msra.mxu0 %v104
    %809 = vmatpush.msra.mxu0 %v103
    %810 = vmatpush.msra.mxu0 %v102
    %811 = vmatpush.msra.mxu0 %v101
    %812 = vmatpush.msra.mxu0 %v100
    %813 = vmatmul.f32.gmra.mxu0 %v795
    %v814 = vpop.f32.mrf.mxu0
    %v815 = vadd.f32 %v108, %v814
    %816 = vdwg.mxu0
    %v817 = vxor.u32 %v815, 2147483648
    %v818 = vmul.f32 %v817, 1.442695
    %v819 = vpow.pop %v818
    %v820 = vadd.f32 %v819, 1.0
    %v821 = vrcp.pop %v820
    %v822 = vmul.f32 %v820, %v821
    %v823 = vsub.f32 1.0, %v822
    %v824 = vmul.f32 %v821, %v823
    %v825 = vadd.f32 %v821, %v824
    %vm826 = vweird.f32 %v820
    %vm827 = vweird.f32 %v821
    %vm828 = vmor %vm826, %vm827
    %v829 = vsel %vm828, %v821, %v825
    %v830 = vand.u32 2147483647, %v820
    %vm831 = vcmp.eq.f32.partialorder %v830, 8.507059e+37
    %v832 = vand.u32 %v820, 2147483648
    %v833 = vor.u32 1.1754944e-38, %v832
    %v834 = vsel %vm831, %v833, %v829
    %v835 = vmul.f32 1.0, %v834
    %837 = vrot.lane.b32.xlu0 %v815, 32
    %v838 = vpop.permute.xlu0 %837
    %v840 = vmul.f32 %v835, %v838
    %842 = vrot.lane.b32.xlu0 %v840, 64
    %v843 = vpop.permute.xlu0 %842
    %v845 = vadd.f32 %v815, %v843
    %v846 = vtanh.pop %v845
    %v847 = vsub.f32 1.0, %v835
    %849 = vrot.lane.b32.xlu0 %v846, 96
    %v850 = vpop.permute.xlu0 %849
    %v852 = vmul.f32 %v847, %v850
    %v853 = vmul.f32 %v835, %v710
    %v854 = vadd.f32 %v852, %v853
    %v855 = vmax.f32 %v854, 0.0
    %v856 = vmul.f32 %v855, %v281
    %v857 = vadd.f32 %v713, %v856
    %v858 = vrot.slane %v784, 4
    %859 = vrot.lane.b32.xlu0 %v858, 96
    %v860 = vpop.permute.xlu0 %859
    %v861 = vsel %vm141, %v860, 0
    %863 = vmatpush.msra.mxu0 0.0
    %864 = vmatpush.msra.mxu0 0.0
    %865 = vmatpush.msra.mxu0 0.0
    %866 = vmatpush.msra.mxu0 0.0
    %867 = vmatpush.msra.mxu0 0.0
    %868 = vmatpush.msra.mxu0 0.0
    %869 = vmatpush.msra.mxu0 0.0
    %870 = vmatpush.msra.mxu0 0.0
    %871 = vmatpush.msra.mxu0 0.0
    %872 = vmatpush.msra.mxu0 0.0
    %873 = vmatpush.msra.mxu0 0.0
    %874 = vmatpush.msra.mxu0 0.0
    %875 = vmatpush.msra.mxu0 %v98
    %876 = vmatpush.msra.mxu0 %v97
    %877 = vmatpush.msra.mxu0 %v96
    %878 = vmatpush.msra.mxu0 %v95
    %879 = vmatmul.f32.gmra.mxu0 %v861
    %v880 = vpop.f32.mrf.mxu0
    %v881 = vadd.f32 0.0, %v880
    %882 = vdwg.mxu0
    %v884 = vrot.slane %v881, 3
    %v886 = vadd.f32 %v139, %v884
    %v887 = vxor.u32 %v886, 2147483648
    %v888 = vmul.f32 %v887, 1.442695
    %v889 = vpow.pop %v888
    %v890 = vadd.f32 %v889, 1.0
    %v891 = vrcp.pop %v890
    %v892 = vmul.f32 %v890, %v891
    %v893 = vsub.f32 1.0, %v892
    %v894 = vmul.f32 %v891, %v893
    %v895 = vadd.f32 %v891, %v894
    %vm896 = vweird.f32 %v890
    %vm897 = vweird.f32 %v891
    %vm898 = vmor %vm896, %vm897
    %v899 = vsel %vm898, %v891, %v895
    %v900 = vand.u32 2147483647, %v890
    %vm901 = vcmp.eq.f32.partialorder %v900, 8.507059e+37
    %v902 = vand.u32 %v890, 2147483648
    %v903 = vor.u32 1.1754944e-38, %v902
    %v904 = vsel %vm901, %v903, %v899
    %v905 = vmul.f32 1.0, %v904
    %v906 = vadd.f32 %v881, %v188
    %v908 = vrot.slane %v906, 3
    %909 = vrot.lane.b32.xlu0 %v908, 64
    %v910 = vpop.permute.xlu0 %909
    %v912 = vmul.f32 %v905, %v910
    %914 = vrot.lane.b32.xlu0 %v912, 64
    %v915 = vpop.permute.xlu0 %914
    %v917 = vadd.f32 %v139, %v915
    %v918 = vtanh.pop %v917
    %v919 = vsub.f32 1.0, %v905
    %921 = vrot.lane.b32.xlu0 %v918, 96
    %v922 = vpop.permute.xlu0 %921
    %v924 = vmul.f32 %v919, %v922
    %v925 = vrot.slane %v784, 7
    %v927 = vmul.f32 %v905, %v925
    %v928 = vadd.f32 %v924, %v927
    %930 = vrot.lane.b32.xlu0 %v928, 96
    %v931 = vpop.permute.xlu0 %930
    %v934 = vrot.slane %v854, 3
    %v936 = vsel %vm141, %v931, %v934
    %v938 = vrot.slane %v936, 5
    %v939 = vsel %vm215, %v938, 0
    %941 = vmatpush.msra.mxu0 0.0
    %942 = vmatpush.msra.mxu0 0.0
    %943 = vmatpush.msra.mxu0 0.0
    %944 = vmatpush.msra.mxu0 0.0
    %945 = vmatpush.msra.mxu0 0.0
    %946 = vmatpush.msra.mxu0 0.0
    %947 = vmatpush.msra.mxu0 0.0
    %948 = vmatpush.msra.mxu0 0.0
    %949 = vmatpush.msra.mxu0 %v107
    %950 = vmatpush.msra.mxu0 %v106
    %951 = vmatpush.msra.mxu0 %v105
    %952 = vmatpush.msra.mxu0 %v104
    %953 = vmatpush.msra.mxu0 %v103
    %954 = vmatpush.msra.mxu0 %v102
    %955 = vmatpush.msra.mxu0 %v101
    %956 = vmatpush.msra.mxu0 %v100
    %957 = vmatmul.f32.gmra.mxu0 %v939
    %v958 = vpop.f32.mrf.mxu0
    %v959 = vadd.f32 %v108, %v958
    %960 = vdwg.mxu0
    %v961 = vxor.u32 %v959, 2147483648
    %v962 = vmul.f32 %v961, 1.442695
    %v963 = vpow.pop %v962
    %v964 = vadd.f32 %v963, 1.0
    %v965 = vrcp.pop %v964
    %v966 = vmul.f32 %v964, %v965
    %v967 = vsub.f32 1.0, %v966
    %v968 = vmul.f32 %v965, %v967
    %v969 = vadd.f32 %v965, %v968
    %vm970 = vweird.f32 %v964
    %vm971 = vweird.f32 %v965
    %vm972 = vmor %vm970, %vm971
    %v973 = vsel %vm972, %v965, %v969
    %v974 = vand.u32 2147483647, %v964
    %vm975 = vcmp.eq.f32.partialorder %v974, 8.507059e+37
    %v976 = vand.u32 %v964, 2147483648
    %v977 = vor.u32 1.1754944e-38, %v976
    %v978 = vsel %vm975, %v977, %v973
    %v979 = vmul.f32 1.0, %v978
    %981 = vrot.lane.b32.xlu0 %v959, 32
    %v982 = vpop.permute.xlu0 %981
    %v984 = vmul.f32 %v979, %v982
    %986 = vrot.lane.b32.xlu0 %v984, 64
    %v987 = vpop.permute.xlu0 %986
    %v989 = vadd.f32 %v959, %v987
    %v990 = vtanh.pop %v989
    %v991 = vsub.f32 1.0, %v979
    %993 = vrot.lane.b32.xlu0 %v990, 96
    %v994 = vpop.permute.xlu0 %993
    %v996 = vmul.f32 %v991, %v994
    %v997 = vmul.f32 %v979, %v854
    %v998 = vadd.f32 %v996, %v997
    %v999 = vmax.f32 %v998, 0.0
    %v1000 = vmul.f32 %v999, %v281
    %v1001 = vadd.f32 %v857, %v1000
    %v1002 = vrot.slane %v928, 5
    %1003 = vrot.lane.b32.xlu0 %v1002, 96
    %v1004 = vpop.permute.xlu0 %1003
    %v1005 = vsel %vm141, %v1004, 0
    %1007 = vmatpush.msra.mxu0 0.0
    %1008 = vmatpush.msra.mxu0 0.0
    %1009 = vmatpush.msra.mxu0 0.0
    %1010 = vmatpush.msra.mxu0 0.0
    %1011 = vmatpush.msra.mxu0 0.0
    %1012 = vmatpush.msra.mxu0 0.0
    %1013 = vmatpush.msra.mxu0 0.0
    %1014 = vmatpush.msra.mxu0 0.0
    %1015 = vmatpush.msra.mxu0 0.0
    %1016 = vmatpush.msra.mxu0 0.0
    %1017 = vmatpush.msra.mxu0 0.0
    %1018 = vmatpush.msra.mxu0 0.0
    %1019 = vmatpush.msra.mxu0 %v98
    %1020 = vmatpush.msra.mxu0 %v97
    %1021 = vmatpush.msra.mxu0 %v96
    %1022 = vmatpush.msra.mxu0 %v95
    %1023 = vmatmul.f32.gmra.mxu0 %v1005
    %v1024 = vpop.f32.mrf.mxu0
    %v1025 = vadd.f32 0.0, %v1024
    %1026 = vdwg.mxu0
    %v1028 = vrot.slane %v1025, 2
    %v1030 = vadd.f32 %v139, %v1028
    %v1031 = vxor.u32 %v1030, 2147483648
    %v1032 = vmul.f32 %v1031, 1.442695
    %v1033 = vpow.pop %v1032
    %v1034 = vadd.f32 %v1033, 1.0
    %v1035 = vrcp.pop %v1034
    %v1036 = vmul.f32 %v1034, %v1035
    %v1037 = vsub.f32 1.0, %v1036
    %v1038 = vmul.f32 %v1035, %v1037
    %v1039 = vadd.f32 %v1035, %v1038
    %vm1040 = vweird.f32 %v1034
    %vm1041 = vweird.f32 %v1035
    %vm1042 = vmor %vm1040, %vm1041
    %v1043 = vsel %vm1042, %v1035, %v1039
    %v1044 = vand.u32 2147483647, %v1034
    %vm1045 = vcmp.eq.f32.partialorder %v1044, 8.507059e+37
    %v1046 = vand.u32 %v1034, 2147483648
    %v1047 = vor.u32 1.1754944e-38, %v1046
    %v1048 = vsel %vm1045, %v1047, %v1043
    %v1049 = vmul.f32 1.0, %v1048
    %v1050 = vadd.f32 %v1025, %v188
    %v1052 = vrot.slane %v1050, 2
    %1053 = vrot.lane.b32.xlu0 %v1052, 64
    %v1054 = vpop.permute.xlu0 %1053
    %v1056 = vmul.f32 %v1049, %v1054
    %1058 = vrot.lane.b32.xlu0 %v1056, 64
    %v1059 = vpop.permute.xlu0 %1058
    %v1061 = vadd.f32 %v139, %v1059
    %v1062 = vtanh.pop %v1061
    %v1063 = vsub.f32 1.0, %v1049
    %1065 = vrot.lane.b32.xlu0 %v1062, 96
    %v1066 = vpop.permute.xlu0 %1065
    %v1068 = vmul.f32 %v1063, %v1066
    %v1069 = vrot.slane %v928, 7
    %v1071 = vmul.f32 %v1049, %v1069
    %v1072 = vadd.f32 %v1068, %v1071
    %1074 = vrot.lane.b32.xlu0 %v1072, 96
    %v1075 = vpop.permute.xlu0 %1074
    %v1078 = vrot.slane %v998, 2
    %v1080 = vsel %vm141, %v1075, %v1078
    %v1082 = vrot.slane %v1080, 6
    %v1083 = vsel %vm215, %v1082, 0
    %1085 = vmatpush.msra.mxu0 0.0
    %1086 = vmatpush.msra.mxu0 0.0
    %1087 = vmatpush.msra.mxu0 0.0
    %1088 = vmatpush.msra.mxu0 0.0
    %1089 = vmatpush.msra.mxu0 0.0
    %1090 = vmatpush.msra.mxu0 0.0
    %1091 = vmatpush.msra.mxu0 0.0
    %1092 = vmatpush.msra.mxu0 0.0
    %1093 = vmatpush.msra.mxu0 %v107
    %1094 = vmatpush.msra.mxu0 %v106
    %1095 = vmatpush.msra.mxu0 %v105
    %1096 = vmatpush.msra.mxu0 %v104
    %1097 = vmatpush.msra.mxu0 %v103
    %1098 = vmatpush.msra.mxu0 %v102
    %1099 = vmatpush.msra.mxu0 %v101
    %1100 = vmatpush.msra.mxu0 %v100
    %1101 = vmatmul.f32.gmra.mxu0 %v1083
    %v1102 = vpop.f32.mrf.mxu0
    %v1103 = vadd.f32 %v108, %v1102
    %1104 = vdwg.mxu0
    %v1105 = vxor.u32 %v1103, 2147483648
    %v1106 = vmul.f32 %v1105, 1.442695
    %v1107 = vpow.pop %v1106
    %v1108 = vadd.f32 %v1107, 1.0
    %v1109 = vrcp.pop %v1108
    %v1110 = vmul.f32 %v1108, %v1109
    %v1111 = vsub.f32 1.0, %v1110
    %v1112 = vmul.f32 %v1109, %v1111
    %v1113 = vadd.f32 %v1109, %v1112
    %vm1114 = vweird.f32 %v1108
    %vm1115 = vweird.f32 %v1109
    %vm1116 = vmor %vm1114, %vm1115
    %v1117 = vsel %vm1116, %v1109, %v1113
    %v1118 = vand.u32 2147483647, %v1108
    %vm1119 = vcmp.eq.f32.partialorder %v1118, 8.507059e+37
    %v1120 = vand.u32 %v1108, 2147483648
    %v1121 = vor.u32 1.1754944e-38, %v1120
    %v1122 = vsel %vm1119, %v1121, %v1117
    %v1123 = vmul.f32 1.0, %v1122
    %1125 = vrot.lane.b32.xlu0 %v1103, 32
    %v1126 = vpop.permute.xlu0 %1125
    %v1128 = vmul.f32 %v1123, %v1126
    %1130 = vrot.lane.b32.xlu0 %v1128, 64
    %v1131 = vpop.permute.xlu0 %1130
    %v1133 = vadd.f32 %v1103, %v1131
    %v1134 = vtanh.pop %v1133
    %v1135 = vsub.f32 1.0, %v1123
    %1137 = vrot.lane.b32.xlu0 %v1134, 96
    %v1138 = vpop.permute.xlu0 %1137
    %v1140 = vmul.f32 %v1135, %v1138
    %v1141 = vmul.f32 %v1123, %v998
    %v1142 = vadd.f32 %v1140, %v1141
    %v1143 = vmax.f32 %v1142, 0.0
    %v1144 = vmul.f32 %v1143, %v281
    %v1145 = vadd.f32 %v1001, %v1144
    %v1146 = vrot.slane %v1072, 6
    %1147 = vrot.lane.b32.xlu0 %v1146, 96
    %v1148 = vpop.permute.xlu0 %1147
    %v1149 = vsel %vm141, %v1148, 0
    %1151 = vmatpush.msra.mxu0 0.0
    %1152 = vmatpush.msra.mxu0 0.0
    %1153 = vmatpush.msra.mxu0 0.0
    %1154 = vmatpush.msra.mxu0 0.0
    %1155 = vmatpush.msra.mxu0 0.0
    %1156 = vmatpush.msra.mxu0 0.0
    %1157 = vmatpush.msra.mxu0 0.0
    %1158 = vmatpush.msra.mxu0 0.0
    %1159 = vmatpush.msra.mxu0 0.0
    %1160 = vmatpush.msra.mxu0 0.0
    %1161 = vmatpush.msra.mxu0 0.0
    %1162 = vmatpush.msra.mxu0 0.0
    %1163 = vmatpush.msra.mxu0 %v98
    %1164 = vmatpush.msra.mxu0 %v97
    %1165 = vmatpush.msra.mxu0 %v96
    %1166 = vmatpush.msra.mxu0 %v95
    %1167 = vmatmul.f32.gmra.mxu0 %v1149
    %v1168 = vpop.f32.mrf.mxu0
    %v1169 = vadd.f32 0.0, %v1168
    %1170 = vdwg.mxu0
    %v1172 = vrot.slane %v1169, 1
    %v1174 = vadd.f32 %v139, %v1172
    %v1175 = vxor.u32 %v1174, 2147483648
    %v1176 = vmul.f32 %v1175, 1.442695
    %v1177 = vpow.pop %v1176
    %v1178 = vadd.f32 %v1177, 1.0
    %v1179 = vrcp.pop %v1178
    %v1180 = vmul.f32 %v1178, %v1179
    %v1181 = vsub.f32 1.0, %v1180
    %v1182 = vmul.f32 %v1179, %v1181
    %v1183 = vadd.f32 %v1179, %v1182
    %vm1184 = vweird.f32 %v1178
    %vm1185 = vweird.f32 %v1179
    %vm1186 = vmor %vm1184, %vm1185
    %v1187 = vsel %vm1186, %v1179, %v1183
    %v1188 = vand.u32 2147483647, %v1178
    %vm1189 = vcmp.eq.f32.partialorder %v1188, 8.507059e+37
    %v1190 = vand.u32 %v1178, 2147483648
    %v1191 = vor.u32 1.1754944e-38, %v1190
    %v1192 = vsel %vm1189, %v1191, %v1187
    %v1193 = vmul.f32 1.0, %v1192
    %v1194 = vadd.f32 %v1169, %v188
    %v1196 = vrot.slane %v1194, 1
    %1197 = vrot.lane.b32.xlu0 %v1196, 64
    %v1198 = vpop.permute.xlu0 %1197
    %v1200 = vmul.f32 %v1193, %v1198
    %1202 = vrot.lane.b32.xlu0 %v1200, 64
    %v1203 = vpop.permute.xlu0 %1202
    %v1205 = vadd.f32 %v139, %v1203
    %v1206 = vtanh.pop %v1205
    %v1207 = vsub.f32 1.0, %v1193
    %1209 = vrot.lane.b32.xlu0 %v1206, 96
    %v1210 = vpop.permute.xlu0 %1209
    %v1212 = vmul.f32 %v1207, %v1210
    %v1213 = vrot.slane %v1072, 7
    %v1215 = vmul.f32 %v1193, %v1213
    %v1216 = vadd.f32 %v1212, %v1215
    %1218 = vrot.lane.b32.xlu0 %v1216, 96
    %v1219 = vpop.permute.xlu0 %1218
    %v1222 = vrot.slane %v1142, 1
    %v1224 = vsel %vm141, %v1219, %v1222
    %v1226 = vrot.slane %v1224, 7
    %v1227 = vsel %vm215, %v1226, 0
    %1229 = vmatpush.msra.mxu0 0.0
    %1230 = vmatpush.msra.mxu0 0.0
    %1231 = vmatpush.msra.mxu0 0.0
    %1232 = vmatpush.msra.mxu0 0.0
    %1233 = vmatpush.msra.mxu0 0.0
    %1234 = vmatpush.msra.mxu0 0.0
    %1235 = vmatpush.msra.mxu0 0.0
    %1236 = vmatpush.msra.mxu0 0.0
    %1237 = vmatpush.msra.mxu0 %v107
    %1238 = vmatpush.msra.mxu0 %v106
    %1239 = vmatpush.msra.mxu0 %v105
    %1240 = vmatpush.msra.mxu0 %v104
    %1241 = vmatpush.msra.mxu0 %v103
    %1242 = vmatpush.msra.mxu0 %v102
    %1243 = vmatpush.msra.mxu0 %v101
    %1244 = vmatpush.msra.mxu0 %v100
    %1245 = vmatmul.f32.gmra.mxu0 %v1227
    %v1246 = vpop.f32.mrf.mxu0
    %v1247 = vadd.f32 %v108, %v1246
    %1248 = vdwg.mxu0
    %v1249 = vxor.u32 %v1247, 2147483648
    %v1250 = vmul.f32 %v1249, 1.442695
    %v1251 = vpow.pop %v1250
    %v1252 = vadd.f32 %v1251, 1.0
    %v1253 = vrcp.pop %v1252
    %v1254 = vmul.f32 %v1252, %v1253
    %v1255 = vsub.f32 1.0, %v1254
    %v1256 = vmul.f32 %v1253, %v1255
    %v1257 = vadd.f32 %v1253, %v1256
    %vm1258 = vweird.f32 %v1252
    %vm1259 = vweird.f32 %v1253
    %vm1260 = vmor %vm1258, %vm1259
    %v1261 = vsel %vm1260, %v1253, %v1257
    %v1262 = vand.u32 2147483647, %v1252
    %vm1263 = vcmp.eq.f32.partialorder %v1262, 8.507059e+37
    %v1264 = vand.u32 %v1252, 2147483648
    %v1265 = vor.u32 1.1754944e-38, %v1264
    %v1266 = vsel %vm1263, %v1265, %v1261
    %v1267 = vmul.f32 1.0, %v1266
    %1269 = vrot.lane.b32.xlu0 %v1247, 32
    %v1270 = vpop.permute.xlu0 %1269
    %v1272 = vmul.f32 %v1267, %v1270
    %1274 = vrot.lane.b32.xlu0 %v1272, 64
    %v1275 = vpop.permute.xlu0 %1274
    %v1277 = vadd.f32 %v1247, %v1275
    %v1278 = vtanh.pop %v1277
    %v1279 = vsub.f32 1.0, %v1267
    %1281 = vrot.lane.b32.xlu0 %v1278, 96
    %v1282 = vpop.permute.xlu0 %1281
    %v1284 = vmul.f32 %v1279, %v1282
    %v1285 = vmul.f32 %v1267, %v1142
    %v1286 = vadd.f32 %v1284, %v1285
    %v1287 = vmax.f32 %v1286, 0.0
    %v1288 = vmul.f32 %v1287, %v281
    %v1289 = vadd.f32 %v1145, %v1288
    %1291 = vrot.lane.b32.xlu0 %v1289, 96
    %v1292 = vpop.permute.xlu0 %1291
    %vm1294 = vcmask 253952
    %v1295 = vsel %vm1294, %v1292, 0.0
    %1296 = vadd.xlane.f32.xlu0 %v1295
    %v1297 = vpop.xlane.xlu0 %1296
    %v1298 = vrot.slane %v1297, 4
    %v1299 = vadd.f32 %v1297, %v1298
    %v1300 = vrot.slane %v1299, 2
    %v1301 = vadd.f32 %v1299, %v1300
    %v1302 = vrot.slane %v1301, 1
    %v1303 = vadd.f32 %v1301, %v1302
    %s1304 = vtos %v1303
    %s1305 = sld [smem:[#allocation3]]
    %s1306 = smul.f32 %s1305, 8.0
    %s1307 = sadd.f32 %s1304, %s1306
    %v1308 = vstv %s1307
    %vm1309 = vcmask 0
    %1310 = vst.msk [vmem:[#allocation12] sm:$0x1] %vm1309, %v1308
    // Predicated region
    $region54: #{tpu_custom_call.1} parent=1 // pred_check
      _
    $region55: #{tpu_custom_call.1} parent=1 // pred_check_branch
      %1312 = sbr.rel (0) target = $region57
    $region56: #{tpu_custom_call.1} parent=1 // pred_region
      %1314 = vsyncadd [#allocation6], 0
      %s1316 = sshll.u32 [#allocation12], 4
      %s1317 = int_to_ptr.vmem [resolvable:$true] %s1316
      %s1318 = sshll.u32 %s9, 4
      %s1319 = int_to_ptr.hbm [resolvable:$true] %s1318
      %1321 = dma.vmem_to_hbm [thread:$0]  %s1317, 16, %s1319, [#allocation6]
    $region57: #{tpu_custom_call.1} parent=1 // pred_fallthru
      _
    // Predicated region
    $region58: #{tpu_custom_call.1} parent=1 // pred_check
      _
    $region59: #{tpu_custom_call.1} parent=1 // pred_check_branch
      %1323 = sbr.rel (0) target = $region61
    $region60: #{tpu_custom_call.1} parent=1 // pred_region
      %1325 = dma.done [#allocation6], 16
    $region61: #{tpu_custom_call.1} parent=1 // pred_fallthru
      _
    %1326 = vsyncpa [#allocation5], 1
    %1327 = vsyncpa [#allocation8], 1
    %1328 = vsyncpa [#allocation11], 1
    %1329 = vsyncpa [#allocation6], 1

</llo_original>
